<compile_context>
chip_gen: v6e
topology: v6e:2x2x1
jax: 0.10.0
libtpu: 0.0.40
codegen_flags: <defaults>
</compile_context>

<pallas_src>
import functools
import math

import jax
import jax.numpy as jnp
from jax import lax
from jax.experimental import pallas as pl
from jax.experimental.pallas import tpu as pltpu

LN_EPS = 1e-12          # Roberta layer_norm_eps
MASK_VALUE = -10000.0   # HF additive mask value


def _layer_norm(x, gamma, beta):
    mean = jnp.mean(x, axis=-1, keepdims=True)
    var = jnp.mean((x - mean) ** 2, axis=-1, keepdims=True)
    return (x - mean) * lax.rsqrt(var + LN_EPS) * gamma + beta


def _gelu_exact(x):
    # exact (erf-based) GELU, matching HF "gelu"
    return 0.5 * x * (1.0 + lax.erf(x * (1.0 / math.sqrt(2.0))))


# ---------------------------------------------------------------------------
# Pallas kernel: one full RobertaLayer for a block of batch elements.
# ---------------------------------------------------------------------------
def roberta_layer_kernel(
    x_ref, mask_ref,
    wqkv_ref, bqkv_ref,
    wo_ref, bo_ref, g1_ref, be1_ref,
    wi_ref, bi_ref, wf_ref, bf_ref, g2_ref, be2_ref,
    o_ref,
    *, num_heads, head_dim,
):
    Bb, S, H = x_ref.shape
    x = x_ref[...]                                  # (Bb, S, H) f32
    x_flat = x.reshape(Bb * S, H)                   # fold batch into matmul M
    mask = mask_ref[...]                            # (Bb, 1, S) additive

    # Fused QKV projection (1/sqrt(dh) already folded into q columns on host).
    qkv = jnp.dot(x_flat.astype(jnp.bfloat16), wqkv_ref[...],
                  preferred_element_type=jnp.float32) + bqkv_ref[...]  # (Bb*S, 3H)

    # Per-head attention.  Each head's context is folded directly into the
    # output projection via the matching K-slice of wo (lane-dense N = H) and
    # accumulated in f32 registers -- no ctx scratch, no masked lane stores.
    attn_flat = None
    for h in range(num_heads):                      # static unroll over heads
        qs = slice(h * head_dim, (h + 1) * head_dim)
        ks = slice(H + h * head_dim, H + (h + 1) * head_dim)
        vs = slice(2 * H + h * head_dim, 2 * H + (h + 1) * head_dim)
        qh = qkv[:, qs].reshape(Bb, S, head_dim).astype(jnp.bfloat16)
        kh = qkv[:, ks].reshape(Bb, S, head_dim).astype(jnp.bfloat16)
        vh = qkv[:, vs].reshape(Bb, S, head_dim).astype(jnp.bfloat16)

        s = jnp.einsum("bqd,bkd->bqk", qh, kh,
                       preferred_element_type=jnp.float32)   # (Bb, S, S)
        s = s + mask                                          # keys axis
        s = s - jnp.max(s, axis=-1, keepdims=True)
        p = jnp.exp(s)
        p = p * pl.reciprocal(jnp.sum(p, axis=-1, keepdims=True), approx=True)

        ctx_h = jnp.einsum("bqk,bkd->bqd", p.astype(jnp.bfloat16), vh,
                           preferred_element_type=jnp.float32)  # (Bb, S, dh)
        contrib = jnp.dot(
            ctx_h.reshape(Bb * S, head_dim).astype(jnp.bfloat16),
            wo_ref[h * head_dim:(h + 1) * head_dim, :],        # (dh, H) slice
            preferred_element_type=jnp.float32)                # (Bb*S, H)
        attn_flat = contrib if attn_flat is None else attn_flat + contrib

    attn_out = attn_flat + bo_ref[...]
    h1 = _layer_norm(attn_out + x_flat, g1_ref[...], be1_ref[...])

    inter = _gelu_exact(
        jnp.dot(h1.astype(jnp.bfloat16), wi_ref[...],
                preferred_element_type=jnp.float32) + bi_ref[...])
    ffn = jnp.dot(inter.astype(jnp.bfloat16), wf_ref[...],
                  preferred_element_type=jnp.float32) + bf_ref[...]
    out = _layer_norm(ffn + h1, g2_ref[...], be2_ref[...])

    o_ref[...] = out.reshape(Bb, S, H)


# ---------------------------------------------------------------------------
# Host-side parameter prep (done ONCE per model, not per layer call).
# ---------------------------------------------------------------------------
def _fuse_layer_params(p, num_heads):
    """Fold 1/sqrt(dh) into q, fuse QKV, cast matmul weights to bf16."""
    H = p["wq"].shape[0]
    scale = 1.0 / math.sqrt(H // num_heads)
    wqkv = jnp.concatenate([p["wq"] * scale, p["wk"], p["wv"]], axis=1)
    bqkv = jnp.concatenate([p["bq"] * scale, p["bk"], p["bv"]], axis=1)
    return dict(
        wqkv=wqkv.astype(jnp.bfloat16), bqkv=bqkv.astype(jnp.float32),
        wo=p["wo"].astype(jnp.bfloat16), bo=p["bo"],
        g1=p["g1"], be1=p["be1"],
        wi=p["wi"].astype(jnp.bfloat16), bi=p["bi"],
        wf=p["wf"].astype(jnp.bfloat16), bf=p["bf"],
        g2=p["g2"], be2=p["be2"],
    )


def fuse_all_layer_params(layers_params, num_heads):
    return [_fuse_layer_params(p, num_heads) for p in layers_params]


# ---------------------------------------------------------------------------
# Generation-aware block / VMEM sizing.
# ---------------------------------------------------------------------------
def _vmem_capacity_bytes():
    try:
        cap = getattr(pltpu.get_tpu_info(), "vmem_capacity_bytes", None)
        if cap:
            return int(cap)
    except Exception:
        pass
    return 64 << 20   # conservative fallback (v7x per-TC)


def _weight_bytes(H, I):
    # bf16 matmul weights + f32 biases / LN params
    return 2 * (H * 3 * H + H * H + H * I + I * H) + 4 * (3 * H + 6 * H + I)


def _pick_block_b(B, S, H, I, vmem_cap):
    """Largest divisor of B that (a) fits a VMEM budget, (b) caps matmul M
    around 256 (past which the MXU sees no benefit), and (c) leaves >= 2 grid
    steps so the parallel batch axis can shard across v7x TCs and the auto
    pipeline can overlap DMAs."""
    fixed = 2 * _weight_bytes(H, I)                    # double-buffered weights
    per_b = 4 * S * (3 * H + 8 * H + I) + 4 * S * S    # f32 working set / batch elt
    per_b += 2 * 2 * 4 * S * H                         # double-buffered x/out blocks
    budget = max(vmem_cap // 2 - fixed, per_b)
    cap_vmem = max(1, budget // per_b)
    cap_mxu = max(1, -(-256 // S))                     # ceil(256 / S)
    cap_grid = max(1, B // 2) if B >= 2 else 1
    cap = max(1, min(cap_vmem, cap_mxu, cap_grid))
    bb = 1
    for d in range(1, B + 1):
        if B % d == 0 and d <= cap:
            bb = d
    return bb


def _vmem_limit_bytes(vmem_cap, block_b, S, H, I):
    est = 2 * _weight_bytes(H, I)
    est += 2 * 2 * 4 * block_b * S * H                 # x/out blocks, double-buffered
    est += 4 * block_b * S * (3 * H + 8 * H + I)       # activations
    limit = max(32 << 20, 4 * est)                     # generous headroom
    return int(min(limit, int(vmem_cap * 0.75)))


# ---------------------------------------------------------------------------
# One RobertaLayer over [B, S, H] via a Pallas call (grid over batch blocks).
# Expects ALREADY-FUSED params (fuse_all_layer_params).
# ---------------------------------------------------------------------------
def run_layer(x, addmask, fp, num_heads):
    B, S, H = x.shape
    I = fp["wi"].shape[1]
    head_dim = H // num_heads

    vmem_cap = _vmem_capacity_bytes()
    block_b = _pick_block_b(B, S, H, I, vmem_cap)
    vmem_limit = _vmem_limit_bytes(vmem_cap, block_b, S, H, I)

    kernel = functools.partial(
        roberta_layer_kernel, num_heads=num_heads, head_dim=head_dim)

    def full(shape):
        nd = len(shape)
        return pl.BlockSpec(shape, lambda b, _nd=nd: (0,) * _nd)

    in_specs = [
        pl.BlockSpec((block_b, S, H), lambda b: (b, 0, 0)),   # x
        pl.BlockSpec((block_b, 1, S), lambda b: (b, 0, 0)),   # additive mask
        full((H, 3 * H)), full((1, 3 * H)),                   # fused wqkv, bqkv
        full((H, H)), full((1, H)),                           # wo, bo
        full((1, H)), full((1, H)),                           # ln1 gamma, beta
        full((H, I)), full((1, I)),                           # wi, bi
        full((I, H)), full((1, H)),                           # wf, bf
        full((1, H)), full((1, H)),                           # ln2 gamma, beta
    ]
    out_specs = pl.BlockSpec((block_b, S, H), lambda b: (b, 0, 0))

    return pl.pallas_call(
        kernel,
        out_shape=jax.ShapeDtypeStruct((B, S, H), jnp.float32),
        grid=(B // block_b,),
        in_specs=in_specs,
        out_specs=out_specs,
        compiler_params=pltpu.CompilerParams(
            dimension_semantics=("parallel",),     # batch blocks independent
            vmem_limit_bytes=vmem_limit),
    )(x, addmask,
      fp["wqkv"], fp["bqkv"],
      fp["wo"], fp["bo"], fp["g1"], fp["be1"],
      fp["wi"], fp["bi"], fp["wf"], fp["bf"], fp["g2"], fp["be2"])


# ---------------------------------------------------------------------------
# Encoder driver: mirrors RobertaEncoder4Mix.forward (eval mode, no head_mask /
# cross-attention / cache / gradient checkpointing / output_attentions).
# ---------------------------------------------------------------------------
def encoder4mix_forward(layers_params, hidden_states, attention_mask,
                        hidden_states2=None, attention_mask2=None,
                        mix_lambda=None, mix_layer=None, num_heads=4,
                        layer_fn=None):
    layer_fn = layer_fn or run_layer
    for i, p in enumerate(layers_params):
        hidden_states = layer_fn(hidden_states, attention_mask, p, num_heads)
        if mix_layer is not None:
            assert mix_layer >= 0 and mix_lambda > 0
            assert hidden_states2 is not None and attention_mask2 is not None
            # The torch code runs the layer on hidden_states2 for i <= mix_layer
            # but never uses the result (hidden_states2 is never reassigned).
            # Skipping that dead call preserves eval-mode forward semantics.
            if i == mix_layer:
                hidden_states = (mix_lambda * hidden_states
                                 + (1.0 - mix_lambda) * hidden_states2)
    return hidden_states


# ---------------------------------------------------------------------------
# Pure-JAX f32 reference (for correctness check only)
# ---------------------------------------------------------------------------
def ref_layer(x, addmask, p, num_heads):
    B, S, H = x.shape
    dh = H // num_heads
    q = x @ p["wq"] + p["bq"]
    k = x @ p["wk"] + p["bk"]
    v = x @ p["wv"] + p["bv"]
    qh = q.reshape(B, S, num_heads, dh).transpose(0, 2, 1, 3)
    kh = k.reshape(B, S, num_heads, dh).transpose(0, 2, 1, 3)
    vh = v.reshape(B, S, num_heads, dh).transpose(0, 2, 1, 3)
    scores = jnp.einsum("bhqd,bhkd->bhqk", qh, kh) / math.sqrt(dh)
    scores = scores + addmask[:, None, :, :]        # (B,1,S) -> (B,1,1,S)
    probs = jax.nn.softmax(scores, axis=-1)
    ctx = jnp.einsum("bhqk,bhkd->bhqd", probs, vh)
    ctx = ctx.transpose(0, 2, 1, 3).reshape(B, S, H)
    attn_out = ctx @ p["wo"] + p["bo"]
    h1 = _layer_norm(attn_out + x, p["g1"], p["be1"])
    inter = _gelu_exact(h1 @ p["wi"] + p["bi"])
    ffn = inter @ p["wf"] + p["bf"]
    return _layer_norm(ffn + h1, p["g2"], p["be2"])


def init_layer_params(key, H, I):
    ks = jax.random.split(key, 12)
    s = 0.02
    n = lambda k, shape: (s * jax.random.normal(k, shape)).astype(jnp.float32)
    return dict(
        wq=n(ks[0], (H, H)), bq=n(ks[1], (1, H)),
        wk=n(ks[2], (H, H)), bk=n(ks[3], (1, H)),
        wv=n(ks[4], (H, H)), bv=n(ks[5], (1, H)),
        wo=n(ks[6], (H, H)), bo=n(ks[7], (1, H)),
        g1=jnp.ones((1, H), jnp.float32), be1=jnp.zeros((1, H), jnp.float32),
        wi=n(ks[8], (H, I)), bi=n(ks[9], (1, I)),
        wf=n(ks[10], (I, H)), bf=n(ks[11], (1, H)),
        g2=jnp.ones((1, H), jnp.float32), be2=jnp.zeros((1, H), jnp.float32),
    )


if __name__ == "__main__":
    # config: num_hidden_layers=2, hidden=128, heads=4, intermediate=256
    B, S, H, NH, I, L = 2, 8, 128, 4, 256, 2
    mix_layer, mix_lambda = 0, 0.7

    key = jax.random.PRNGKey(0)
    k1, k2, kp = jax.random.split(key, 3)
    x1 = jax.random.normal(k1, (B, S, H), jnp.float32)
    x2 = jax.random.normal(k2, (B, S, H), jnp.float32)

    # token masks (1 = keep); second stream has padding on the tail
    m1 = jnp.ones((B, S), jnp.float32)
    m2 = jnp.ones((B, S), jnp.float32).at[:, 6:].set(0.0)
    add1 = ((1.0 - m1) * MASK_VALUE).reshape(B, 1, S)
    add2 = ((1.0 - m2) * MASK_VALUE).reshape(B, 1, S)

    layer_keys = jax.random.split(kp, L)
    params = [init_layer_params(layer_keys[i], H, I) for i in range(L)]
    fused_params = fuse_all_layer_params(params, NH)   # fused ONCE per model

    out = encoder4mix_forward(fused_params, x1, add1, x2, add2,
                              mix_lambda=mix_lambda, mix_layer=mix_layer,
                              num_heads=NH, layer_fn=run_layer)
    out = jax.block_until_ready(out)

    ref = encoder4mix_forward(params, x1, add1, x2, add2,
                              mix_lambda=mix_lambda, mix_layer=mix_layer,
                              num_heads=NH, layer_fn=ref_layer)

    assert out.shape == (B, S, H)
    max_err = float(jnp.max(jnp.abs(out - ref)))
    # bf16 matmul inputs (f32 accumulation) dominate the tolerance here.
    assert max_err < 5e-2, f"mismatch vs reference: {max_err}"
    print("KERNEL_OK")
</pallas_src>

<mosaic_0001>
module attributes {stable_mosaic.version = 11 : i64} {
  func.func @roberta_layer_kernel(%arg0: i32, %arg1: memref<1x8x128xf32, #tpu.memory_space<vmem>>, %arg2: memref<1x1x8xf32, #tpu.memory_space<vmem>>, %arg3: memref<128x384xbf16, #tpu.memory_space<vmem>>, %arg4: memref<1x384xf32, #tpu.memory_space<vmem>>, %arg5: memref<128x128xbf16, #tpu.memory_space<vmem>>, %arg6: memref<1x128xf32, #tpu.memory_space<vmem>>, %arg7: memref<1x128xf32, #tpu.memory_space<vmem>>, %arg8: memref<1x128xf32, #tpu.memory_space<vmem>>, %arg9: memref<128x256xbf16, #tpu.memory_space<vmem>>, %arg10: memref<1x256xf32, #tpu.memory_space<vmem>>, %arg11: memref<256x128xbf16, #tpu.memory_space<vmem>>, %arg12: memref<1x128xf32, #tpu.memory_space<vmem>>, %arg13: memref<1x128xf32, #tpu.memory_space<vmem>>, %arg14: memref<1x128xf32, #tpu.memory_space<vmem>>, %arg15: memref<1x8x128xf32, #tpu.memory_space<vmem>>) attributes {dimension_semantics = [#tpu.dimension_semantics<parallel>], iteration_bounds = array<i64: 2>, scalar_prefetch = 0 : i64, scratch_operands = 0 : i64, tpu.core_type = #tpu.core_type<tc>, window_params = [{transform_indices = @transform_0, window_bounds = array<i64: 1, 8, 128>}, {transform_indices = @transform_1, window_bounds = array<i64: 1, 1, 8>}, {pipeline_mode = #tpu.pipeline_mode<synchronous>, transform_indices = @transform_2, window_bounds = array<i64: 128, 384>}, {pipeline_mode = #tpu.pipeline_mode<synchronous>, transform_indices = @transform_3, window_bounds = array<i64: 1, 384>}, {pipeline_mode = #tpu.pipeline_mode<synchronous>, transform_indices = @transform_4, window_bounds = array<i64: 128, 128>}, {pipeline_mode = #tpu.pipeline_mode<synchronous>, transform_indices = @transform_5, window_bounds = array<i64: 1, 128>}, {pipeline_mode = #tpu.pipeline_mode<synchronous>, transform_indices = @transform_6, window_bounds = array<i64: 1, 128>}, {pipeline_mode = #tpu.pipeline_mode<synchronous>, transform_indices = @transform_7, window_bounds = array<i64: 1, 128>}, {pipeline_mode = #tpu.pipeline_mode<synchronous>, transform_indices = @transform_8, window_bounds = array<i64: 128, 256>}, {pipeline_mode = #tpu.pipeline_mode<synchronous>, transform_indices = @transform_9, window_bounds = array<i64: 1, 256>}, {pipeline_mode = #tpu.pipeline_mode<synchronous>, transform_indices = @transform_10, window_bounds = array<i64: 256, 128>}, {pipeline_mode = #tpu.pipeline_mode<synchronous>, transform_indices = @transform_11, window_bounds = array<i64: 1, 128>}, {pipeline_mode = #tpu.pipeline_mode<synchronous>, transform_indices = @transform_12, window_bounds = array<i64: 1, 128>}, {pipeline_mode = #tpu.pipeline_mode<synchronous>, transform_indices = @transform_13, window_bounds = array<i64: 1, 128>}, {transform_indices = @transform_14, window_bounds = array<i64: 1, 8, 128>}]} {
    %c0 = arith.constant 0 : index
    %c0_0 = arith.constant 0 : index
    %c0_1 = arith.constant 0 : index
    %0 = vector.load %arg1[%c0, %c0_0, %c0_1] : memref<1x8x128xf32, #tpu.memory_space<vmem>>, vector<1x8x128xf32>
    %1 = vector.shape_cast %0 : vector<1x8x128xf32> to vector<8x128xf32>
    %c0_2 = arith.constant 0 : index
    %c0_3 = arith.constant 0 : index
    %c0_4 = arith.constant 0 : index
    %2 = vector.load %arg2[%c0_2, %c0_3, %c0_4] : memref<1x1x8xf32, #tpu.memory_space<vmem>>, vector<1x1x8xf32>
    %3 = arith.truncf %1 : vector<8x128xf32> to vector<8x128xbf16>
    %c0_5 = arith.constant 0 : index
    %c0_6 = arith.constant 0 : index
    %4 = vector.load %arg3[%c0_5, %c0_6] : memref<128x384xbf16, #tpu.memory_space<vmem>>, vector<128x384xbf16>
    %cst = arith.constant dense<0.000000e+00> : vector<8x384xf32>
    %5 = tpu.matmul %3, %4, %cst {dimension_numbers = #tpu.dot_dimension_numbers<[1], [0], [0], [1], [0, 0, 1, 1], [], []>} : vector<8x128xbf16>, vector<128x384xbf16>, vector<8x384xf32> -> vector<8x384xf32>
    %c0_7 = arith.constant 0 : index
    %c0_8 = arith.constant 0 : index
    %6 = vector.load %arg4[%c0_7, %c0_8] : memref<1x384xf32, #tpu.memory_space<vmem>>, vector<1x384xf32>
    %7 = vector.broadcast %6 : vector<1x384xf32> to vector<8x384xf32>
    %8 = arith.addf %5, %7 : vector<8x384xf32>
    %9 = vector.extract_strided_slice %8 {offsets = [0, 0], sizes = [8, 32], strides = [1, 1]} : vector<8x384xf32> to vector<8x32xf32>
    %10 = vector.shape_cast %9 : vector<8x32xf32> to vector<1x8x32xf32>
    %11 = arith.truncf %10 : vector<1x8x32xf32> to vector<1x8x32xbf16>
    %12 = vector.extract_strided_slice %8 {offsets = [0, 128], sizes = [8, 32], strides = [1, 1]} : vector<8x384xf32> to vector<8x32xf32>
    %13 = vector.shape_cast %12 : vector<8x32xf32> to vector<1x8x32xf32>
    %14 = arith.truncf %13 : vector<1x8x32xf32> to vector<1x8x32xbf16>
    %15 = vector.extract_strided_slice %8 {offsets = [0, 256], sizes = [8, 32], strides = [1, 1]} : vector<8x384xf32> to vector<8x32xf32>
    %16 = vector.shape_cast %15 : vector<8x32xf32> to vector<1x8x32xf32>
    %17 = arith.truncf %16 : vector<1x8x32xf32> to vector<1x8x32xbf16>
    "tpu.trace_start"() <{level = 10 : i32, message = "bqd,bkd->bqk"}> : () -> ()
    %cst_9 = arith.constant dense<0.000000e+00> : vector<1x8x8xf32>
    %18 = tpu.matmul %11, %14, %cst_9 {dimension_numbers = #tpu.dot_dimension_numbers<[2], [2], [1], [1], [0, 0, 0, 1, 1, 1], [0], [0]>} : vector<1x8x32xbf16>, vector<1x8x32xbf16>, vector<1x8x8xf32> -> vector<1x8x8xf32>
    "tpu.trace_stop"() : () -> ()
    %19 = vector.broadcast %2 : vector<1x1x8xf32> to vector<1x8x8xf32>
    %20 = arith.addf %18, %19 : vector<1x8x8xf32>
    %cst_10 = arith.constant dense<0xFF800000> : vector<1x8xf32>
    %21 = vector.multi_reduction <maximumf>, %20, %cst_10 [2] : vector<1x8x8xf32> to vector<1x8xf32>
    %22 = vector.shape_cast %21 : vector<1x8xf32> to vector<1x8x1xf32>
    %23 = vector.broadcast %22 : vector<1x8x1xf32> to vector<1x8x8xf32>
    %24 = arith.subf %20, %23 : vector<1x8x8xf32>
    %25 = math.exp %24 : vector<1x8x8xf32>
    %cst_11 = arith.constant dense<0.000000e+00> : vector<1x8xf32>
    %26 = vector.multi_reduction <add>, %25, %cst_11 [2] : vector<1x8x8xf32> to vector<1x8xf32>
    %27 = vector.shape_cast %26 : vector<1x8xf32> to vector<1x8x1xf32>
    %28 = tpu.reciprocal %27 {approx = true} : vector<1x8x1xf32> -> vector<1x8x1xf32>
    %29 = vector.broadcast %28 : vector<1x8x1xf32> to vector<1x8x8xf32>
    %30 = arith.mulf %25, %29 : vector<1x8x8xf32>
    %31 = arith.truncf %30 : vector<1x8x8xf32> to vector<1x8x8xbf16>
    "tpu.trace_start"() <{level = 10 : i32, message = "bqk,bkd->bqd"}> : () -> ()
    %cst_12 = arith.constant dense<0.000000e+00> : vector<1x8x32xf32>
    %32 = tpu.matmul %31, %17, %cst_12 {dimension_numbers = #tpu.dot_dimension_numbers<[2], [1], [1], [2], [0, 0, 0, 1, 1, 2], [0], [0]>} : vector<1x8x8xbf16>, vector<1x8x32xbf16>, vector<1x8x32xf32> -> vector<1x8x32xf32>
    "tpu.trace_stop"() : () -> ()
    %33 = vector.shape_cast %32 : vector<1x8x32xf32> to vector<8x32xf32>
    %34 = arith.truncf %33 : vector<8x32xf32> to vector<8x32xbf16>
    %c0_13 = arith.constant 0 : index
    %c0_14 = arith.constant 0 : index
    %35 = vector.load %arg5[%c0_13, %c0_14] : memref<128x128xbf16, #tpu.memory_space<vmem>>, vector<32x128xbf16>
    %cst_15 = arith.constant dense<0.000000e+00> : vector<8x128xf32>
    %36 = tpu.matmul %34, %35, %cst_15 {dimension_numbers = #tpu.dot_dimension_numbers<[1], [0], [0], [1], [0, 0, 1, 1], [], []>} : vector<8x32xbf16>, vector<32x128xbf16>, vector<8x128xf32> -> vector<8x128xf32>
    %37 = vector.extract_strided_slice %8 {offsets = [0, 32], sizes = [8, 32], strides = [1, 1]} : vector<8x384xf32> to vector<8x32xf32>
    %38 = vector.shape_cast %37 : vector<8x32xf32> to vector<1x8x32xf32>
    %39 = arith.truncf %38 : vector<1x8x32xf32> to vector<1x8x32xbf16>
    %40 = vector.extract_strided_slice %8 {offsets = [0, 160], sizes = [8, 32], strides = [1, 1]} : vector<8x384xf32> to vector<8x32xf32>
    %41 = vector.shape_cast %40 : vector<8x32xf32> to vector<1x8x32xf32>
    %42 = arith.truncf %41 : vector<1x8x32xf32> to vector<1x8x32xbf16>
    %43 = vector.extract_strided_slice %8 {offsets = [0, 288], sizes = [8, 32], strides = [1, 1]} : vector<8x384xf32> to vector<8x32xf32>
    %44 = vector.shape_cast %43 : vector<8x32xf32> to vector<1x8x32xf32>
    %45 = arith.truncf %44 : vector<1x8x32xf32> to vector<1x8x32xbf16>
    "tpu.trace_start"() <{level = 10 : i32, message = "bqd,bkd->bqk"}> : () -> ()
    %cst_16 = arith.constant dense<0.000000e+00> : vector<1x8x8xf32>
    %46 = tpu.matmul %39, %42, %cst_16 {dimension_numbers = #tpu.dot_dimension_numbers<[2], [2], [1], [1], [0, 0, 0, 1, 1, 1], [0], [0]>} : vector<1x8x32xbf16>, vector<1x8x32xbf16>, vector<1x8x8xf32> -> vector<1x8x8xf32>
    "tpu.trace_stop"() : () -> ()
    %47 = vector.broadcast %2 : vector<1x1x8xf32> to vector<1x8x8xf32>
    %48 = arith.addf %46, %47 : vector<1x8x8xf32>
    %cst_17 = arith.constant dense<0xFF800000> : vector<1x8xf32>
    %49 = vector.multi_reduction <maximumf>, %48, %cst_17 [2] : vector<1x8x8xf32> to vector<1x8xf32>
    %50 = vector.shape_cast %49 : vector<1x8xf32> to vector<1x8x1xf32>
    %51 = vector.broadcast %50 : vector<1x8x1xf32> to vector<1x8x8xf32>
    %52 = arith.subf %48, %51 : vector<1x8x8xf32>
    %53 = math.exp %52 : vector<1x8x8xf32>
    %cst_18 = arith.constant dense<0.000000e+00> : vector<1x8xf32>
    %54 = vector.multi_reduction <add>, %53, %cst_18 [2] : vector<1x8x8xf32> to vector<1x8xf32>
    %55 = vector.shape_cast %54 : vector<1x8xf32> to vector<1x8x1xf32>
    %56 = tpu.reciprocal %55 {approx = true} : vector<1x8x1xf32> -> vector<1x8x1xf32>
    %57 = vector.broadcast %56 : vector<1x8x1xf32> to vector<1x8x8xf32>
    %58 = arith.mulf %53, %57 : vector<1x8x8xf32>
    %59 = arith.truncf %58 : vector<1x8x8xf32> to vector<1x8x8xbf16>
    "tpu.trace_start"() <{level = 10 : i32, message = "bqk,bkd->bqd"}> : () -> ()
    %cst_19 = arith.constant dense<0.000000e+00> : vector<1x8x32xf32>
    %60 = tpu.matmul %59, %45, %cst_19 {dimension_numbers = #tpu.dot_dimension_numbers<[2], [1], [1], [2], [0, 0, 0, 1, 1, 2], [0], [0]>} : vector<1x8x8xbf16>, vector<1x8x32xbf16>, vector<1x8x32xf32> -> vector<1x8x32xf32>
    "tpu.trace_stop"() : () -> ()
    %61 = vector.shape_cast %60 : vector<1x8x32xf32> to vector<8x32xf32>
    %62 = arith.truncf %61 : vector<8x32xf32> to vector<8x32xbf16>
    %c32 = arith.constant 32 : index
    %c0_20 = arith.constant 0 : index
    %63 = vector.load %arg5[%c32, %c0_20] : memref<128x128xbf16, #tpu.memory_space<vmem>>, vector<32x128xbf16>
    %cst_21 = arith.constant dense<0.000000e+00> : vector<8x128xf32>
    %64 = tpu.matmul %62, %63, %cst_21 {dimension_numbers = #tpu.dot_dimension_numbers<[1], [0], [0], [1], [0, 0, 1, 1], [], []>} : vector<8x32xbf16>, vector<32x128xbf16>, vector<8x128xf32> -> vector<8x128xf32>
    %65 = arith.addf %36, %64 : vector<8x128xf32>
    %66 = vector.extract_strided_slice %8 {offsets = [0, 64], sizes = [8, 32], strides = [1, 1]} : vector<8x384xf32> to vector<8x32xf32>
    %67 = vector.shape_cast %66 : vector<8x32xf32> to vector<1x8x32xf32>
    %68 = arith.truncf %67 : vector<1x8x32xf32> to vector<1x8x32xbf16>
    %69 = vector.extract_strided_slice %8 {offsets = [0, 192], sizes = [8, 32], strides = [1, 1]} : vector<8x384xf32> to vector<8x32xf32>
    %70 = vector.shape_cast %69 : vector<8x32xf32> to vector<1x8x32xf32>
    %71 = arith.truncf %70 : vector<1x8x32xf32> to vector<1x8x32xbf16>
    %72 = vector.extract_strided_slice %8 {offsets = [0, 320], sizes = [8, 32], strides = [1, 1]} : vector<8x384xf32> to vector<8x32xf32>
    %73 = vector.shape_cast %72 : vector<8x32xf32> to vector<1x8x32xf32>
    %74 = arith.truncf %73 : vector<1x8x32xf32> to vector<1x8x32xbf16>
    "tpu.trace_start"() <{level = 10 : i32, message = "bqd,bkd->bqk"}> : () -> ()
    %cst_22 = arith.constant dense<0.000000e+00> : vector<1x8x8xf32>
    %75 = tpu.matmul %68, %71, %cst_22 {dimension_numbers = #tpu.dot_dimension_numbers<[2], [2], [1], [1], [0, 0, 0, 1, 1, 1], [0], [0]>} : vector<1x8x32xbf16>, vector<1x8x32xbf16>, vector<1x8x8xf32> -> vector<1x8x8xf32>
    "tpu.trace_stop"() : () -> ()
    %76 = vector.broadcast %2 : vector<1x1x8xf32> to vector<1x8x8xf32>
    %77 = arith.addf %75, %76 : vector<1x8x8xf32>
    %cst_23 = arith.constant dense<0xFF800000> : vector<1x8xf32>
    %78 = vector.multi_reduction <maximumf>, %77, %cst_23 [2] : vector<1x8x8xf32> to vector<1x8xf32>
    %79 = vector.shape_cast %78 : vector<1x8xf32> to vector<1x8x1xf32>
    %80 = vector.broadcast %79 : vector<1x8x1xf32> to vector<1x8x8xf32>
    %81 = arith.subf %77, %80 : vector<1x8x8xf32>
    %82 = math.exp %81 : vector<1x8x8xf32>
    %cst_24 = arith.constant dense<0.000000e+00> : vector<1x8xf32>
    %83 = vector.multi_reduction <add>, %82, %cst_24 [2] : vector<1x8x8xf32> to vector<1x8xf32>
    %84 = vector.shape_cast %83 : vector<1x8xf32> to vector<1x8x1xf32>
    %85 = tpu.reciprocal %84 {approx = true} : vector<1x8x1xf32> -> vector<1x8x1xf32>
    %86 = vector.broadcast %85 : vector<1x8x1xf32> to vector<1x8x8xf32>
    %87 = arith.mulf %82, %86 : vector<1x8x8xf32>
    %88 = arith.truncf %87 : vector<1x8x8xf32> to vector<1x8x8xbf16>
    "tpu.trace_start"() <{level = 10 : i32, message = "bqk,bkd->bqd"}> : () -> ()
    %cst_25 = arith.constant dense<0.000000e+00> : vector<1x8x32xf32>
    %89 = tpu.matmul %88, %74, %cst_25 {dimension_numbers = #tpu.dot_dimension_numbers<[2], [1], [1], [2], [0, 0, 0, 1, 1, 2], [0], [0]>} : vector<1x8x8xbf16>, vector<1x8x32xbf16>, vector<1x8x32xf32> -> vector<1x8x32xf32>
    "tpu.trace_stop"() : () -> ()
    %90 = vector.shape_cast %89 : vector<1x8x32xf32> to vector<8x32xf32>
    %91 = arith.truncf %90 : vector<8x32xf32> to vector<8x32xbf16>
    %c64 = arith.constant 64 : index
    %c0_26 = arith.constant 0 : index
    %92 = vector.load %arg5[%c64, %c0_26] : memref<128x128xbf16, #tpu.memory_space<vmem>>, vector<32x128xbf16>
    %cst_27 = arith.constant dense<0.000000e+00> : vector<8x128xf32>
    %93 = tpu.matmul %91, %92, %cst_27 {dimension_numbers = #tpu.dot_dimension_numbers<[1], [0], [0], [1], [0, 0, 1, 1], [], []>} : vector<8x32xbf16>, vector<32x128xbf16>, vector<8x128xf32> -> vector<8x128xf32>
    %94 = arith.addf %65, %93 : vector<8x128xf32>
    %95 = vector.extract_strided_slice %8 {offsets = [0, 96], sizes = [8, 32], strides = [1, 1]} : vector<8x384xf32> to vector<8x32xf32>
    %96 = vector.shape_cast %95 : vector<8x32xf32> to vector<1x8x32xf32>
    %97 = arith.truncf %96 : vector<1x8x32xf32> to vector<1x8x32xbf16>
    %98 = vector.extract_strided_slice %8 {offsets = [0, 224], sizes = [8, 32], strides = [1, 1]} : vector<8x384xf32> to vector<8x32xf32>
    %99 = vector.shape_cast %98 : vector<8x32xf32> to vector<1x8x32xf32>
    %100 = arith.truncf %99 : vector<1x8x32xf32> to vector<1x8x32xbf16>
    %101 = vector.extract_strided_slice %8 {offsets = [0, 352], sizes = [8, 32], strides = [1, 1]} : vector<8x384xf32> to vector<8x32xf32>
    %102 = vector.shape_cast %101 : vector<8x32xf32> to vector<1x8x32xf32>
    %103 = arith.truncf %102 : vector<1x8x32xf32> to vector<1x8x32xbf16>
    "tpu.trace_start"() <{level = 10 : i32, message = "bqd,bkd->bqk"}> : () -> ()
    %cst_28 = arith.constant dense<0.000000e+00> : vector<1x8x8xf32>
    %104 = tpu.matmul %97, %100, %cst_28 {dimension_numbers = #tpu.dot_dimension_numbers<[2], [2], [1], [1], [0, 0, 0, 1, 1, 1], [0], [0]>} : vector<1x8x32xbf16>, vector<1x8x32xbf16>, vector<1x8x8xf32> -> vector<1x8x8xf32>
    "tpu.trace_stop"() : () -> ()
    %105 = vector.broadcast %2 : vector<1x1x8xf32> to vector<1x8x8xf32>
    %106 = arith.addf %104, %105 : vector<1x8x8xf32>
    %cst_29 = arith.constant dense<0xFF800000> : vector<1x8xf32>
    %107 = vector.multi_reduction <maximumf>, %106, %cst_29 [2] : vector<1x8x8xf32> to vector<1x8xf32>
    %108 = vector.shape_cast %107 : vector<1x8xf32> to vector<1x8x1xf32>
    %109 = vector.broadcast %108 : vector<1x8x1xf32> to vector<1x8x8xf32>
    %110 = arith.subf %106, %109 : vector<1x8x8xf32>
    %111 = math.exp %110 : vector<1x8x8xf32>
    %cst_30 = arith.constant dense<0.000000e+00> : vector<1x8xf32>
    %112 = vector.multi_reduction <add>, %111, %cst_30 [2] : vector<1x8x8xf32> to vector<1x8xf32>
    %113 = vector.shape_cast %112 : vector<1x8xf32> to vector<1x8x1xf32>
    %114 = tpu.reciprocal %113 {approx = true} : vector<1x8x1xf32> -> vector<1x8x1xf32>
    %115 = vector.broadcast %114 : vector<1x8x1xf32> to vector<1x8x8xf32>
    %116 = arith.mulf %111, %115 : vector<1x8x8xf32>
    %117 = arith.truncf %116 : vector<1x8x8xf32> to vector<1x8x8xbf16>
    "tpu.trace_start"() <{level = 10 : i32, message = "bqk,bkd->bqd"}> : () -> ()
    %cst_31 = arith.constant dense<0.000000e+00> : vector<1x8x32xf32>
    %118 = tpu.matmul %117, %103, %cst_31 {dimension_numbers = #tpu.dot_dimension_numbers<[2], [1], [1], [2], [0, 0, 0, 1, 1, 2], [0], [0]>} : vector<1x8x8xbf16>, vector<1x8x32xbf16>, vector<1x8x32xf32> -> vector<1x8x32xf32>
    "tpu.trace_stop"() : () -> ()
    %119 = vector.shape_cast %118 : vector<1x8x32xf32> to vector<8x32xf32>
    %120 = arith.truncf %119 : vector<8x32xf32> to vector<8x32xbf16>
    %c96 = arith.constant 96 : index
    %c0_32 = arith.constant 0 : index
    %121 = vector.load %arg5[%c96, %c0_32] : memref<128x128xbf16, #tpu.memory_space<vmem>>, vector<32x128xbf16>
    %cst_33 = arith.constant dense<0.000000e+00> : vector<8x128xf32>
    %122 = tpu.matmul %120, %121, %cst_33 {dimension_numbers = #tpu.dot_dimension_numbers<[1], [0], [0], [1], [0, 0, 1, 1], [], []>} : vector<8x32xbf16>, vector<32x128xbf16>, vector<8x128xf32> -> vector<8x128xf32>
    %123 = arith.addf %94, %122 : vector<8x128xf32>
    %c0_34 = arith.constant 0 : index
    %c0_35 = arith.constant 0 : index
    %124 = vector.load %arg6[%c0_34, %c0_35] : memref<1x128xf32, #tpu.memory_space<vmem>>, vector<1x128xf32>
    %125 = vector.broadcast %124 : vector<1x128xf32> to vector<8x128xf32>
    %126 = arith.addf %123, %125 : vector<8x128xf32>
    %127 = arith.addf %126, %1 : vector<8x128xf32>
    %c0_36 = arith.constant 0 : index
    %c0_37 = arith.constant 0 : index
    %128 = vector.load %arg7[%c0_36, %c0_37] : memref<1x128xf32, #tpu.memory_space<vmem>>, vector<1x128xf32>
    %c0_38 = arith.constant 0 : index
    %c0_39 = arith.constant 0 : index
    %129 = vector.load %arg8[%c0_38, %c0_39] : memref<1x128xf32, #tpu.memory_space<vmem>>, vector<1x128xf32>
    %cst_40 = arith.constant dense<0.000000e+00> : vector<8xf32>
    %130 = vector.multi_reduction <add>, %127, %cst_40 [1] : vector<8x128xf32> to vector<8xf32>
    %131 = vector.shape_cast %130 : vector<8xf32> to vector<8x1xf32>
    %cst_41 = arith.constant 1.280000e+02 : f32
    %132 = vector.broadcast %cst_41 : f32 to vector<8x1xf32>
    %133 = arith.divf %131, %132 : vector<8x1xf32>
    %134 = vector.broadcast %133 : vector<8x1xf32> to vector<8x128xf32>
    %135 = arith.subf %127, %134 : vector<8x128xf32>
    %136 = arith.mulf %135, %135 : vector<8x128xf32>
    %cst_42 = arith.constant dense<0.000000e+00> : vector<8xf32>
    %137 = vector.multi_reduction <add>, %136, %cst_42 [1] : vector<8x128xf32> to vector<8xf32>
    %138 = vector.shape_cast %137 : vector<8xf32> to vector<8x1xf32>
    %cst_43 = arith.constant 1.280000e+02 : f32
    %139 = vector.broadcast %cst_43 : f32 to vector<8x1xf32>
    %140 = arith.divf %138, %139 : vector<8x1xf32>
    %141 = vector.broadcast %133 : vector<8x1xf32> to vector<8x128xf32>
    %142 = arith.subf %127, %141 : vector<8x128xf32>
    %cst_44 = arith.constant 9.99999996E-13 : f32
    %143 = vector.broadcast %cst_44 : f32 to vector<8x1xf32>
    %144 = arith.addf %140, %143 : vector<8x1xf32>
    %145 = math.rsqrt %144 : vector<8x1xf32>
    %146 = vector.broadcast %145 : vector<8x1xf32> to vector<8x128xf32>
    %147 = arith.mulf %142, %146 : vector<8x128xf32>
    %148 = vector.broadcast %128 : vector<1x128xf32> to vector<8x128xf32>
    %149 = arith.mulf %147, %148 : vector<8x128xf32>
    %150 = vector.broadcast %129 : vector<1x128xf32> to vector<8x128xf32>
    %151 = arith.addf %149, %150 : vector<8x128xf32>
    %152 = arith.truncf %151 : vector<8x128xf32> to vector<8x128xbf16>
    %c0_45 = arith.constant 0 : index
    %c0_46 = arith.constant 0 : index
    %153 = vector.load %arg9[%c0_45, %c0_46] : memref<128x256xbf16, #tpu.memory_space<vmem>>, vector<128x256xbf16>
    %cst_47 = arith.constant dense<0.000000e+00> : vector<8x256xf32>
    %154 = tpu.matmul %152, %153, %cst_47 {dimension_numbers = #tpu.dot_dimension_numbers<[1], [0], [0], [1], [0, 0, 1, 1], [], []>} : vector<8x128xbf16>, vector<128x256xbf16>, vector<8x256xf32> -> vector<8x256xf32>
    %c0_48 = arith.constant 0 : index
    %c0_49 = arith.constant 0 : index
    %155 = vector.load %arg10[%c0_48, %c0_49] : memref<1x256xf32, #tpu.memory_space<vmem>>, vector<1x256xf32>
    %156 = vector.broadcast %155 : vector<1x256xf32> to vector<8x256xf32>
    %157 = arith.addf %154, %156 : vector<8x256xf32>
    %cst_50 = arith.constant 5.000000e-01 : f32
    %158 = vector.broadcast %cst_50 : f32 to vector<8x256xf32>
    %159 = arith.mulf %158, %157 : vector<8x256xf32>
    %cst_51 = arith.constant 0.707106769 : f32
    %160 = vector.broadcast %cst_51 : f32 to vector<8x256xf32>
    %161 = arith.mulf %157, %160 : vector<8x256xf32>
    %162 = math.erf %161 : vector<8x256xf32>
    %cst_52 = arith.constant 1.000000e+00 : f32
    %163 = vector.broadcast %cst_52 : f32 to vector<8x256xf32>
    %164 = arith.addf %163, %162 : vector<8x256xf32>
    %165 = arith.mulf %159, %164 : vector<8x256xf32>
    %166 = arith.truncf %165 : vector<8x256xf32> to vector<8x256xbf16>
    %c0_53 = arith.constant 0 : index
    %c0_54 = arith.constant 0 : index
    %167 = vector.load %arg11[%c0_53, %c0_54] : memref<256x128xbf16, #tpu.memory_space<vmem>>, vector<256x128xbf16>
    %cst_55 = arith.constant dense<0.000000e+00> : vector<8x128xf32>
    %168 = tpu.matmul %166, %167, %cst_55 {dimension_numbers = #tpu.dot_dimension_numbers<[1], [0], [0], [1], [0, 0, 1, 1], [], []>} : vector<8x256xbf16>, vector<256x128xbf16>, vector<8x128xf32> -> vector<8x128xf32>
    %c0_56 = arith.constant 0 : index
    %c0_57 = arith.constant 0 : index
    %169 = vector.load %arg12[%c0_56, %c0_57] : memref<1x128xf32, #tpu.memory_space<vmem>>, vector<1x128xf32>
    %170 = vector.broadcast %169 : vector<1x128xf32> to vector<8x128xf32>
    %171 = arith.addf %168, %170 : vector<8x128xf32>
    %172 = arith.addf %171, %151 : vector<8x128xf32>
    %c0_58 = arith.constant 0 : index
    %c0_59 = arith.constant 0 : index
    %173 = vector.load %arg13[%c0_58, %c0_59] : memref<1x128xf32, #tpu.memory_space<vmem>>, vector<1x128xf32>
    %c0_60 = arith.constant 0 : index
    %c0_61 = arith.constant 0 : index
    %174 = vector.load %arg14[%c0_60, %c0_61] : memref<1x128xf32, #tpu.memory_space<vmem>>, vector<1x128xf32>
    %cst_62 = arith.constant dense<0.000000e+00> : vector<8xf32>
    %175 = vector.multi_reduction <add>, %172, %cst_62 [1] : vector<8x128xf32> to vector<8xf32>
    %176 = vector.shape_cast %175 : vector<8xf32> to vector<8x1xf32>
    %cst_63 = arith.constant 1.280000e+02 : f32
    %177 = vector.broadcast %cst_63 : f32 to vector<8x1xf32>
    %178 = arith.divf %176, %177 : vector<8x1xf32>
    %179 = vector.broadcast %178 : vector<8x1xf32> to vector<8x128xf32>
    %180 = arith.subf %172, %179 : vector<8x128xf32>
    %181 = arith.mulf %180, %180 : vector<8x128xf32>
    %cst_64 = arith.constant dense<0.000000e+00> : vector<8xf32>
    %182 = vector.multi_reduction <add>, %181, %cst_64 [1] : vector<8x128xf32> to vector<8xf32>
    %183 = vector.shape_cast %182 : vector<8xf32> to vector<8x1xf32>
    %cst_65 = arith.constant 1.280000e+02 : f32
    %184 = vector.broadcast %cst_65 : f32 to vector<8x1xf32>
    %185 = arith.divf %183, %184 : vector<8x1xf32>
    %186 = vector.broadcast %178 : vector<8x1xf32> to vector<8x128xf32>
    %187 = arith.subf %172, %186 : vector<8x128xf32>
    %cst_66 = arith.constant 9.99999996E-13 : f32
    %188 = vector.broadcast %cst_66 : f32 to vector<8x1xf32>
    %189 = arith.addf %185, %188 : vector<8x1xf32>
    %190 = math.rsqrt %189 : vector<8x1xf32>
    %191 = vector.broadcast %190 : vector<8x1xf32> to vector<8x128xf32>
    %192 = arith.mulf %187, %191 : vector<8x128xf32>
    %193 = vector.broadcast %173 : vector<1x128xf32> to vector<8x128xf32>
    %194 = arith.mulf %192, %193 : vector<8x128xf32>
    %195 = vector.broadcast %174 : vector<1x128xf32> to vector<8x128xf32>
    %196 = arith.addf %194, %195 : vector<8x128xf32>
    %197 = vector.shape_cast %196 : vector<8x128xf32> to vector<1x8x128xf32>
    %c0_67 = arith.constant 0 : index
    %c0_68 = arith.constant 0 : index
    %c0_69 = arith.constant 0 : index
    %198 = vector.load %arg15[%c0_67, %c0_68, %c0_69] : memref<1x8x128xf32, #tpu.memory_space<vmem>>, vector<1x8x128xf32>
    tpu.vector_store %arg15[%c0_67, %c0_68, %c0_69], %197 {strides = array<i32>} : memref<1x8x128xf32, #tpu.memory_space<vmem>>, vector<1x8x128xf32>,
    return
  }
  func.func @transform_0(%arg0: i32) -> (i32, i32, i32) {
    %c0_i32 = arith.constant 0 : i32
    %c0_i32_0 = arith.constant 0 : i32
    %c0_i32_1 = arith.constant 0 : i32
    return %arg0, %c0_i32, %c0_i32_0 : i32, i32, i32
  }
  func.func @transform_1(%arg0: i32) -> (i32, i32, i32) {
    %c0_i32 = arith.constant 0 : i32
    %c0_i32_0 = arith.constant 0 : i32
    %c0_i32_1 = arith.constant 0 : i32
    return %arg0, %c0_i32, %c0_i32_0 : i32, i32, i32
  }
  func.func @transform_2(%arg0: i32) -> (i32, i32) {
    %c0_i32 = arith.constant 0 : i32
    %c0_i32_0 = arith.constant 0 : i32
    %c0_i32_1 = arith.constant 0 : i32
    return %c0_i32, %c0_i32_0 : i32, i32
  }
  func.func @transform_3(%arg0: i32) -> (i32, i32) {
    %c0_i32 = arith.constant 0 : i32
    %c0_i32_0 = arith.constant 0 : i32
    %c0_i32_1 = arith.constant 0 : i32
    return %c0_i32, %c0_i32_0 : i32, i32
  }
  func.func @transform_4(%arg0: i32) -> (i32, i32) {
    %c0_i32 = arith.constant 0 : i32
    %c0_i32_0 = arith.constant 0 : i32
    %c0_i32_1 = arith.constant 0 : i32
    return %c0_i32, %c0_i32_0 : i32, i32
  }
  func.func @transform_5(%arg0: i32) -> (i32, i32) {
    %c0_i32 = arith.constant 0 : i32
    %c0_i32_0 = arith.constant 0 : i32
    %c0_i32_1 = arith.constant 0 : i32
    return %c0_i32, %c0_i32_0 : i32, i32
  }
  func.func @transform_6(%arg0: i32) -> (i32, i32) {
    %c0_i32 = arith.constant 0 : i32
    %c0_i32_0 = arith.constant 0 : i32
    %c0_i32_1 = arith.constant 0 : i32
    return %c0_i32, %c0_i32_0 : i32, i32
  }
  func.func @transform_7(%arg0: i32) -> (i32, i32) {
    %c0_i32 = arith.constant 0 : i32
    %c0_i32_0 = arith.constant 0 : i32
    %c0_i32_1 = arith.constant 0 : i32
    return %c0_i32, %c0_i32_0 : i32, i32
  }
  func.func @transform_8(%arg0: i32) -> (i32, i32) {
    %c0_i32 = arith.constant 0 : i32
    %c0_i32_0 = arith.constant 0 : i32
    %c0_i32_1 = arith.constant 0 : i32
    return %c0_i32, %c0_i32_0 : i32, i32
  }
  func.func @transform_9(%arg0: i32) -> (i32, i32) {
    %c0_i32 = arith.constant 0 : i32
    %c0_i32_0 = arith.constant 0 : i32
    %c0_i32_1 = arith.constant 0 : i32
    return %c0_i32, %c0_i32_0 : i32, i32
  }
  func.func @transform_10(%arg0: i32) -> (i32, i32) {
    %c0_i32 = arith.constant 0 : i32
    %c0_i32_0 = arith.constant 0 : i32
    %c0_i32_1 = arith.constant 0 : i32
    return %c0_i32, %c0_i32_0 : i32, i32
  }
  func.func @transform_11(%arg0: i32) -> (i32, i32) {
    %c0_i32 = arith.constant 0 : i32
    %c0_i32_0 = arith.constant 0 : i32
    %c0_i32_1 = arith.constant 0 : i32
    return %c0_i32, %c0_i32_0 : i32, i32
  }
  func.func @transform_12(%arg0: i32) -> (i32, i32) {
    %c0_i32 = arith.constant 0 : i32
    %c0_i32_0 = arith.constant 0 : i32
    %c0_i32_1 = arith.constant 0 : i32
    return %c0_i32, %c0_i32_0 : i32, i32
  }
  func.func @transform_13(%arg0: i32) -> (i32, i32) {
    %c0_i32 = arith.constant 0 : i32
    %c0_i32_0 = arith.constant 0 : i32
    %c0_i32_1 = arith.constant 0 : i32
    return %c0_i32, %c0_i32_0 : i32, i32
  }
  func.func @transform_14(%arg0: i32) -> (i32, i32, i32) {
    %c0_i32 = arith.constant 0 : i32
    %c0_i32_0 = arith.constant 0 : i32
    %c0_i32_1 = arith.constant 0 : i32
    return %arg0, %c0_i32, %c0_i32_0 : i32, i32, i32
  }
}

</mosaic_0001>

<llo_original>
// kernel: tpu_custom_call.1
$region0: #{tpu_custom_call.1}
  #allocation0 [shape = 'u32[]', space=smem, size = 0x4, offset = 0x4, fixed_abs, tag = 'smem constant byte address 0x4 - core index']
  #allocation1 [shape = 'u32[144,128]{1,0:T(1,128)}', space=vmem, size = 0x12000, scoped, tag = 'internal scratch']
  %s0 = inlined_call_operand.hbm [shape: f32[2,8,128], index: 0, kind: input, shape index: {}]
  %s1 = inlined_call_operand.hbm [shape: f32[2,1,8], index: 1, kind: input, shape index: {}]
  %s2 = inlined_call_operand.hbm [shape: bf16[128,384], index: 2, kind: input, shape index: {}]
  %s3 = inlined_call_operand.vmem [shape: f32[1,384], index: 3, kind: input, shape index: {}]
  %s4 = inlined_call_operand.hbm [shape: bf16[128,128], index: 4, kind: input, shape index: {}]
  %s5 = inlined_call_operand.vmem [shape: f32[1,128], index: 5, kind: input, shape index: {}]
  %s6 = inlined_call_operand.vmem [shape: f32[1,128], index: 6, kind: input, shape index: {}]
  %s7 = inlined_call_operand.vmem [shape: f32[1,128], index: 7, kind: input, shape index: {}]
  %s8 = inlined_call_operand.hbm [shape: bf16[128,256], index: 8, kind: input, shape index: {}]
  %s9 = inlined_call_operand.vmem [shape: f32[1,256], index: 9, kind: input, shape index: {}]
  %s10 = inlined_call_operand.hbm [shape: bf16[256,128], index: 10, kind: input, shape index: {}]
  %s11 = inlined_call_operand.vmem [shape: f32[1,128], index: 11, kind: input, shape index: {}]
  %s12 = inlined_call_operand.vmem [shape: f32[1,128], index: 12, kind: input, shape index: {}]
  %s13 = inlined_call_operand.vmem [shape: f32[1,128], index: 13, kind: input, shape index: {}]
  %s14 = inlined_call_operand.hbm [shape: f32[2,8,128], index: 14, kind: output, shape index: {}]
  %s15 = sld [smem:[#allocation0]]
  $region113: #{tpu_custom_call.1} parent=0
    _
  %s17 = ssub.s32 1, %s15
  %s18 = scalar_select 0, %s17, %s15
  $region1: #{tpu_custom_call.1} parent=0
    #allocation2 [shape = 'u8[8192]{0}', space=vmem, size = 0x2000, scoped, tag = 'input window, operand 0']
    #allocation3 [shape = 's32[2]{0}', space=sflag, size = 0x8, scoped, tag = 'scoped memory for tpu_custom_call.1']
    #allocation4 [shape = 's32[2]{0}', space=sflag, size = 0x8, scoped, tag = 'scoped memory for tpu_custom_call.1']
    #allocation5 [shape = 'u8[1024]{0}', space=vmem, size = 0x400, scoped, tag = 'input window, operand 1']
    #allocation6 [shape = 's32[2]{0}', space=sflag, size = 0x8, scoped, tag = 'scoped memory for tpu_custom_call.1']
    #allocation7 [shape = 'u8[98304]{0}', space=vmem, size = 0x18000, scoped, tag = 'input window, operand 2, single buffered']
    #allocation8 [shape = 'u8[32768]{0}', space=vmem, size = 0x8000, scoped, tag = 'input window, operand 4, single buffered']
    #allocation9 [shape = 's32[1]{0}', space=sflag, size = 0x4, scoped, tag = 'scoped memory for tpu_custom_call.1']
    #allocation10 [shape = 'u8[65536]{0}', space=vmem, size = 0x10000, scoped, tag = 'input window, operand 8, single buffered']
    #allocation11 [shape = 'u8[65536]{0}', space=vmem, size = 0x10000, scoped, tag = 'input window, operand 10, single buffered']
    #allocation12 [shape = 's32[1]{0}', space=sflag, size = 0x4, scoped, tag = 'scoped memory for tpu_custom_call.1']
    #allocation13 [shape = 'u8[8192]{0}', space=vmem, size = 0x2000, scoped, tag = 'output window, operand 0']
    %19 = vsyncpa [#allocation3], 0
    %s20 = scalar_lea.sflag [#allocation3], 1
    %21 = vsyncpa %s20, 0
    %22 = vsyncpa [#allocation6], 0
    %s23 = scalar_lea.sflag [#allocation6], 1
    %24 = vsyncpa %s23, 0
    %25 = vsyncpa [#allocation9], 0
    %26 = vsyncpa [#allocation12], 0
    %27 = vsyncpa [#allocation4], 0
    %s28 = scalar_lea.sflag [#allocation4], 1
    %29 = vsyncpa %s28, 0
    loop: start=0, step=1, limit=4
    $region2: #{tpu_custom_call.1} parent=1 // loop_pre_header
      _
    $region3: #{tpu_custom_call.1} parent=1 // loop_header
      %s31 = sphi 0, %s35
      %p32 = scmp.ge.s32.totalorder %s31, 4
      %s41 = sphi 0, %s43
      %s44 = sphi 0, %s41
      %s45 = sphi 0, %s44
      %s61 = sphi 0, %s45
      %s67 = sphi 0, %s69
      %s70 = sphi 0, %s67
      %s71 = sphi 0, %s70
      %s87 = sphi 0, %s71
      %s91 = sphi 0, %s91
      %s93 = sphi 0, %s91
      %s94 = sphi 0, %s93
      %s108 = sphi 0, %s94
      %s112 = sphi 0, %s112
      %s114 = sphi 0, %s112
      %s115 = sphi 0, %s114
      %s129 = sphi 0, %s115
      %s133 = sphi 0, %s133
      %s135 = sphi 0, %s133
      %s136 = sphi 0, %s135
      %s150 = sphi 0, %s136
      %s154 = sphi 0, %s154
      %s156 = sphi 0, %s154
      %s157 = sphi 0, %s156
      %s171 = sphi 0, %s157
      %s175 = sphi 0, %s175
      %s177 = sphi 0, %s175
      %s178 = sphi 0, %s177
      %s192 = sphi 0, %s178
      %s196 = sphi 0, %s196
      %s198 = sphi 0, %s196
      %s199 = sphi 0, %s198
      %s213 = sphi 0, %s199
      %s217 = sphi 0, %s217
      %s219 = sphi 0, %s217
      %s220 = sphi 0, %s219
      %s234 = sphi 0, %s220
      %s238 = sphi 0, %s238
      %s240 = sphi 0, %s238
      %s241 = sphi 0, %s240
      %s255 = sphi 0, %s241
      %s259 = sphi 0, %s259
      %s261 = sphi 0, %s259
      %s262 = sphi 0, %s261
      %s276 = sphi 0, %s262
      %s280 = sphi 0, %s280
      %s282 = sphi 0, %s280
      %s283 = sphi 0, %s282
      %s297 = sphi 0, %s283
      %s301 = sphi 0, %s301
      %s303 = sphi 0, %s301
      %s304 = sphi 0, %s303
      %s318 = sphi 0, %s304
      %s322 = sphi 0, %s322
      %s324 = sphi 0, %s322
      %s325 = sphi 0, %s324
      %s339 = sphi 0, %s325
      %s345 = sphi 0, %s347
      %s348 = sphi 0, %s345
      %s349 = sphi 0, %s348
      %s365 = sphi 0, %s349
    $region4: #{tpu_custom_call.1} parent=1 // loop_header_branch
      %34 = sbr.rel (%p32) target = $region8
    $region5: #{tpu_custom_call.1} parent=1 // loop_body
      %s36 = ssub.s32 %s31, 1
      %s37 = ssub.s32 %s31, 2
      %s38 = sadd.s32 %s31, 1
      %s39 = ssub.s32 %s31, %s38
      %p40 = scmp.eq.s32.totalorder %s39, 0
      %s42 = sadd.s32 %s41, 1
      %s43 = scalar_select %p40, %s41, %s42
      %p46 = pneg %p40
      %p47 = scmp.eq.s32.totalorder %s31, 1
      %p48 = por %p46, %p47
      %p49 = scmp.ne.s32.totalorder %s41, %s44
      %p50 = scmp.eq.s32.totalorder %s31, 0
      %p51 = por %p49, %p50
      %p52 = scmp.ne.s32.totalorder %s41, %s44
      %p53 = scmp.eq.s32.totalorder %s36, 1
      %p54 = por %p52, %p53
      %p55 = scmp.ne.s32.totalorder %s44, %s45
      %p56 = scmp.eq.s32.totalorder %s36, 0
      %p57 = por %p55, %p56
      %p58 = scmp.ne.s32.totalorder %s44, %s45
      %p59 = scmp.eq.s32.totalorder %s37, 1
      %p60 = por %p58, %p59
      %p62 = scmp.ne.s32.totalorder %s45, %s61
      %p63 = scmp.eq.s32.totalorder %s37, 0
      %p64 = por %p62, %p63
      %s65 = ssub.s32 %s31, %s38
      %p66 = scmp.eq.s32.totalorder %s65, 0
      %s68 = sadd.s32 %s67, 1
      %s69 = scalar_select %p66, %s67, %s68
      %p72 = pneg %p66
      %p73 = scmp.eq.s32.totalorder %s31, 1
      %p74 = por %p72, %p73
      %p75 = scmp.ne.s32.totalorder %s67, %s70
      %p76 = scmp.eq.s32.totalorder %s31, 0
      %p77 = por %p75, %p76
      %p78 = scmp.ne.s32.totalorder %s67, %s70
      %p79 = scmp.eq.s32.totalorder %s36, 1
      %p80 = por %p78, %p79
      %p81 = scmp.ne.s32.totalorder %s70, %s71
      %p82 = scmp.eq.s32.totalorder %s36, 0
      %p83 = por %p81, %p82
      %p84 = scmp.ne.s32.totalorder %s70, %s71
      %p85 = scmp.eq.s32.totalorder %s37, 1
      %p86 = por %p84, %p85
      %p88 = scmp.ne.s32.totalorder %s71, %s87
      %p89 = scmp.eq.s32.totalorder %s37, 0
      %p90 = por %p88, %p89
      %s92 = sadd.s32 %s91, 1
      %p95 = scmp.eq.s32.totalorder %s31, 1
      %p96 = scmp.ne.s32.totalorder %s91, %s93
      %p97 = scmp.eq.s32.totalorder %s31, 0
      %p98 = por %p96, %p97
      %p99 = scmp.ne.s32.totalorder %s91, %s93
      %p100 = scmp.eq.s32.totalorder %s36, 1
      %p101 = por %p99, %p100
      %p102 = scmp.ne.s32.totalorder %s93, %s94
      %p103 = scmp.eq.s32.totalorder %s36, 0
      %p104 = por %p102, %p103
      %p105 = scmp.ne.s32.totalorder %s93, %s94
      %p106 = scmp.eq.s32.totalorder %s37, 1
      %p107 = por %p105, %p106
      %p109 = scmp.ne.s32.totalorder %s94, %s108
      %p110 = scmp.eq.s32.totalorder %s37, 0
      %p111 = por %p109, %p110
      %s113 = sadd.s32 %s112, 1
      %p116 = scmp.eq.s32.totalorder %s31, 1
      %p117 = scmp.ne.s32.totalorder %s112, %s114
      %p118 = scmp.eq.s32.totalorder %s31, 0
      %p119 = por %p117, %p118
      %p120 = scmp.ne.s32.totalorder %s112, %s114
      %p121 = scmp.eq.s32.totalorder %s36, 1
      %p122 = por %p120, %p121
      %p123 = scmp.ne.s32.totalorder %s114, %s115
      %p124 = scmp.eq.s32.totalorder %s36, 0
      %p125 = por %p123, %p124
      %p126 = scmp.ne.s32.totalorder %s114, %s115
      %p127 = scmp.eq.s32.totalorder %s37, 1
      %p128 = por %p126, %p127
      %p130 = scmp.ne.s32.totalorder %s115, %s129
      %p131 = scmp.eq.s32.totalorder %s37, 0
      %p132 = por %p130, %p131
      %s134 = sadd.s32 %s133, 1
      %p137 = scmp.eq.s32.totalorder %s31, 1
      %p138 = scmp.ne.s32.totalorder %s133, %s135
      %p139 = scmp.eq.s32.totalorder %s31, 0
      %p140 = por %p138, %p139
      %p141 = scmp.ne.s32.totalorder %s133, %s135
      %p142 = scmp.eq.s32.totalorder %s36, 1
      %p143 = por %p141, %p142
      %p144 = scmp.ne.s32.totalorder %s135, %s136
      %p145 = scmp.eq.s32.totalorder %s36, 0
      %p146 = por %p144, %p145
      %p147 = scmp.ne.s32.totalorder %s135, %s136
      %p148 = scmp.eq.s32.totalorder %s37, 1
      %p149 = por %p147, %p148
      %p151 = scmp.ne.s32.totalorder %s136, %s150
      %p152 = scmp.eq.s32.totalorder %s37, 0
      %p153 = por %p151, %p152
      %s155 = sadd.s32 %s154, 1
      %p158 = scmp.eq.s32.totalorder %s31, 1
      %p159 = scmp.ne.s32.totalorder %s154, %s156
      %p160 = scmp.eq.s32.totalorder %s31, 0
      %p161 = por %p159, %p160
      %p162 = scmp.ne.s32.totalorder %s154, %s156
      %p163 = scmp.eq.s32.totalorder %s36, 1
      %p164 = por %p162, %p163
      %p165 = scmp.ne.s32.totalorder %s156, %s157
      %p166 = scmp.eq.s32.totalorder %s36, 0
      %p167 = por %p165, %p166
      %p168 = scmp.ne.s32.totalorder %s156, %s157
      %p169 = scmp.eq.s32.totalorder %s37, 1
      %p170 = por %p168, %p169
      %p172 = scmp.ne.s32.totalorder %s157, %s171
      %p173 = scmp.eq.s32.totalorder %s37, 0
      %p174 = por %p172, %p173
      %s176 = sadd.s32 %s175, 1
      %p179 = scmp.eq.s32.totalorder %s31, 1
      %p180 = scmp.ne.s32.totalorder %s175, %s177
      %p181 = scmp.eq.s32.totalorder %s31, 0
      %p182 = por %p180, %p181
      %p183 = scmp.ne.s32.totalorder %s175, %s177
      %p184 = scmp.eq.s32.totalorder %s36, 1
      %p185 = por %p183, %p184
      %p186 = scmp.ne.s32.totalorder %s177, %s178
      %p187 = scmp.eq.s32.totalorder %s36, 0
      %p188 = por %p186, %p187
      %p189 = scmp.ne.s32.totalorder %s177, %s178
      %p190 = scmp.eq.s32.totalorder %s37, 1
      %p191 = por %p189, %p190
      %p193 = scmp.ne.s32.totalorder %s178, %s192
      %p194 = scmp.eq.s32.totalorder %s37, 0
      %p195 = por %p193, %p194
      %s197 = sadd.s32 %s196, 1
      %p200 = scmp.eq.s32.totalorder %s31, 1
      %p201 = scmp.ne.s32.totalorder %s196, %s198
      %p202 = scmp.eq.s32.totalorder %s31, 0
      %p203 = por %p201, %p202
      %p204 = scmp.ne.s32.totalorder %s196, %s198
      %p205 = scmp.eq.s32.totalorder %s36, 1
      %p206 = por %p204, %p205
      %p207 = scmp.ne.s32.totalorder %s198, %s199
      %p208 = scmp.eq.s32.totalorder %s36, 0
      %p209 = por %p207, %p208
      %p210 = scmp.ne.s32.totalorder %s198, %s199
      %p211 = scmp.eq.s32.totalorder %s37, 1
      %p212 = por %p210, %p211
      %p214 = scmp.ne.s32.totalorder %s199, %s213
      %p215 = scmp.eq.s32.totalorder %s37, 0
      %p216 = por %p214, %p215
      %s218 = sadd.s32 %s217, 1
      %p221 = scmp.eq.s32.totalorder %s31, 1
      %p222 = scmp.ne.s32.totalorder %s217, %s219
      %p223 = scmp.eq.s32.totalorder %s31, 0
      %p224 = por %p222, %p223
      %p225 = scmp.ne.s32.totalorder %s217, %s219
      %p226 = scmp.eq.s32.totalorder %s36, 1
      %p227 = por %p225, %p226
      %p228 = scmp.ne.s32.totalorder %s219, %s220
      %p229 = scmp.eq.s32.totalorder %s36, 0
      %p230 = por %p228, %p229
      %p231 = scmp.ne.s32.totalorder %s219, %s220
      %p232 = scmp.eq.s32.totalorder %s37, 1
      %p233 = por %p231, %p232
      %p235 = scmp.ne.s32.totalorder %s220, %s234
      %p236 = scmp.eq.s32.totalorder %s37, 0
      %p237 = por %p235, %p236
      %s239 = sadd.s32 %s238, 1
      %p242 = scmp.eq.s32.totalorder %s31, 1
      %p243 = scmp.ne.s32.totalorder %s238, %s240
      %p244 = scmp.eq.s32.totalorder %s31, 0
      %p245 = por %p243, %p244
      %p246 = scmp.ne.s32.totalorder %s238, %s240
      %p247 = scmp.eq.s32.totalorder %s36, 1
      %p248 = por %p246, %p247
      %p249 = scmp.ne.s32.totalorder %s240, %s241
      %p250 = scmp.eq.s32.totalorder %s36, 0
      %p251 = por %p249, %p250
      %p252 = scmp.ne.s32.totalorder %s240, %s241
      %p253 = scmp.eq.s32.totalorder %s37, 1
      %p254 = por %p252, %p253
      %p256 = scmp.ne.s32.totalorder %s241, %s255
      %p257 = scmp.eq.s32.totalorder %s37, 0
      %p258 = por %p256, %p257
      %s260 = sadd.s32 %s259, 1
      %p263 = scmp.eq.s32.totalorder %s31, 1
      %p264 = scmp.ne.s32.totalorder %s259, %s261
      %p265 = scmp.eq.s32.totalorder %s31, 0
      %p266 = por %p264, %p265
      %p267 = scmp.ne.s32.totalorder %s259, %s261
      %p268 = scmp.eq.s32.totalorder %s36, 1
      %p269 = por %p267, %p268
      %p270 = scmp.ne.s32.totalorder %s261, %s262
      %p271 = scmp.eq.s32.totalorder %s36, 0
      %p272 = por %p270, %p271
      %p273 = scmp.ne.s32.totalorder %s261, %s262
      %p274 = scmp.eq.s32.totalorder %s37, 1
      %p275 = por %p273, %p274
      %p277 = scmp.ne.s32.totalorder %s262, %s276
      %p278 = scmp.eq.s32.totalorder %s37, 0
      %p279 = por %p277, %p278
      %s281 = sadd.s32 %s280, 1
      %p284 = scmp.eq.s32.totalorder %s31, 1
      %p285 = scmp.ne.s32.totalorder %s280, %s282
      %p286 = scmp.eq.s32.totalorder %s31, 0
      %p287 = por %p285, %p286
      %p288 = scmp.ne.s32.totalorder %s280, %s282
      %p289 = scmp.eq.s32.totalorder %s36, 1
      %p290 = por %p288, %p289
      %p291 = scmp.ne.s32.totalorder %s282, %s283
      %p292 = scmp.eq.s32.totalorder %s36, 0
      %p293 = por %p291, %p292
      %p294 = scmp.ne.s32.totalorder %s282, %s283
      %p295 = scmp.eq.s32.totalorder %s37, 1
      %p296 = por %p294, %p295
      %p298 = scmp.ne.s32.totalorder %s283, %s297
      %p299 = scmp.eq.s32.totalorder %s37, 0
      %p300 = por %p298, %p299
      %s302 = sadd.s32 %s301, 1
      %p305 = scmp.eq.s32.totalorder %s31, 1
      %p306 = scmp.ne.s32.totalorder %s301, %s303
      %p307 = scmp.eq.s32.totalorder %s31, 0
      %p308 = por %p306, %p307
      %p309 = scmp.ne.s32.totalorder %s301, %s303
      %p310 = scmp.eq.s32.totalorder %s36, 1
      %p311 = por %p309, %p310
      %p312 = scmp.ne.s32.totalorder %s303, %s304
      %p313 = scmp.eq.s32.totalorder %s36, 0
      %p314 = por %p312, %p313
      %p315 = scmp.ne.s32.totalorder %s303, %s304
      %p316 = scmp.eq.s32.totalorder %s37, 1
      %p317 = por %p315, %p316
      %p319 = scmp.ne.s32.totalorder %s304, %s318
      %p320 = scmp.eq.s32.totalorder %s37, 0
      %p321 = por %p319, %p320
      %s323 = sadd.s32 %s322, 1
      %p326 = scmp.eq.s32.totalorder %s31, 1
      %p327 = scmp.ne.s32.totalorder %s322, %s324
      %p328 = scmp.eq.s32.totalorder %s31, 0
      %p329 = por %p327, %p328
      %p330 = scmp.ne.s32.totalorder %s322, %s324
      %p331 = scmp.eq.s32.totalorder %s36, 1
      %p332 = por %p330, %p331
      %p333 = scmp.ne.s32.totalorder %s324, %s325
      %p334 = scmp.eq.s32.totalorder %s36, 0
      %p335 = por %p333, %p334
      %p336 = scmp.ne.s32.totalorder %s324, %s325
      %p337 = scmp.eq.s32.totalorder %s37, 1
      %p338 = por %p336, %p337
      %p340 = scmp.ne.s32.totalorder %s325, %s339
      %p341 = scmp.eq.s32.totalorder %s37, 0
      %p342 = por %p340, %p341
      %s343 = ssub.s32 %s31, %s38
      %p344 = scmp.eq.s32.totalorder %s343, 0
      %s346 = sadd.s32 %s345, 1
      %s347 = scalar_select %p344, %s345, %s346
      %p350 = pneg %p344
      %p351 = scmp.eq.s32.totalorder %s31, 1
      %p352 = por %p350, %p351
      %p353 = scmp.ne.s32.totalorder %s345, %s348
      %p354 = scmp.eq.s32.totalorder %s31, 0
      %p355 = por %p353, %p354
      %p356 = scmp.ne.s32.totalorder %s345, %s348
      %p357 = scmp.eq.s32.totalorder %s36, 1
      %p358 = por %p356, %p357
      %p359 = scmp.ne.s32.totalorder %s348, %s349
      %p360 = scmp.eq.s32.totalorder %s36, 0
      %p361 = por %p359, %p360
      %p362 = scmp.ne.s32.totalorder %s348, %s349
      %p363 = scmp.eq.s32.totalorder %s37, 1
      %p364 = por %p362, %p363
      %p366 = scmp.ne.s32.totalorder %s349, %s365
      %p367 = scmp.eq.s32.totalorder %s37, 0
      %p368 = por %p366, %p367
      %p369 = scmp.le.s32.totalorder 1, %s31
      %p370 = scmp.lt.s32.totalorder %s31, 3
      %p371 = pnand %p369, %p370
      %p372 = pneg %p371
      // Predicated region
      $region9: #{tpu_custom_call.1} parent=5 // pred_check
        _
      $region10: #{tpu_custom_call.1} parent=5 // pred_check_branch
        %374 = sbr.rel (%p371) target = $region12
      $region11: #{tpu_custom_call.1} parent=5 // pred_region
        %s375 = ssub.s32 %s31, 1
        // Predicated region
        $region13: #{tpu_custom_call.1} parent=11 // pred_check
          %p376 = pneg %p104
        $region14: #{tpu_custom_call.1} parent=11 // pred_check_branch
          %378 = sbr.rel (%p376) target = $region16
        $region15: #{tpu_custom_call.1} parent=11 // pred_region
          %s380 = ssub.s32 3072, 3072
          %381 = vsyncadd [#allocation6], %s380
          %s382 = sshll.u32 [#allocation7], 4
          %s383 = int_to_ptr.vmem [resolvable:$true] %s382
          %388 = dma.hbm_to_vmem [thread:$0]  %s2, 3072, %s383, [#allocation6], 192, 192, 12
        $region16: #{tpu_custom_call.1} parent=11 // pred_fallthru
          _
        // Predicated region
        $region17: #{tpu_custom_call.1} parent=11 // pred_check
          %p389 = pneg %p125
        $region18: #{tpu_custom_call.1} parent=11 // pred_check_branch
          %391 = sbr.rel (%p389) target = $region20
        $region19: #{tpu_custom_call.1} parent=11 // pred_region
          _
        $region20: #{tpu_custom_call.1} parent=11 // pred_fallthru
          _
        // Predicated region
        $region21: #{tpu_custom_call.1} parent=11 // pred_check
          %p392 = pneg %p146
        $region22: #{tpu_custom_call.1} parent=11 // pred_check_branch
          %394 = sbr.rel (%p392) target = $region24
        $region23: #{tpu_custom_call.1} parent=11 // pred_region
          %s396 = ssub.s32 1024, 1024
          %397 = vsyncadd [#allocation9], %s396
          %s398 = sshll.u32 [#allocation8], 4
          %s399 = int_to_ptr.vmem [resolvable:$true] %s398
          %404 = dma.hbm_to_vmem [thread:$0]  %s4, 1024, %s399, [#allocation9], 64, 64, 4
        $region24: #{tpu_custom_call.1} parent=11 // pred_fallthru
          _
        // Predicated region
        $region25: #{tpu_custom_call.1} parent=11 // pred_check
          %p405 = pneg %p167
        $region26: #{tpu_custom_call.1} parent=11 // pred_check_branch
          %407 = sbr.rel (%p405) target = $region28
        $region27: #{tpu_custom_call.1} parent=11 // pred_region
          _
        $region28: #{tpu_custom_call.1} parent=11 // pred_fallthru
          _
        // Predicated region
        $region29: #{tpu_custom_call.1} parent=11 // pred_check
          %p408 = pneg %p188
        $region30: #{tpu_custom_call.1} parent=11 // pred_check_branch
          %410 = sbr.rel (%p408) target = $region32
        $region31: #{tpu_custom_call.1} parent=11 // pred_region
          _
        $region32: #{tpu_custom_call.1} parent=11 // pred_fallthru
          _
        // Predicated region
        $region33: #{tpu_custom_call.1} parent=11 // pred_check
          %p411 = pneg %p209
        $region34: #{tpu_custom_call.1} parent=11 // pred_check_branch
          %413 = sbr.rel (%p411) target = $region36
        $region35: #{tpu_custom_call.1} parent=11 // pred_region
          _
        $region36: #{tpu_custom_call.1} parent=11 // pred_fallthru
          _
        // Predicated region
        $region37: #{tpu_custom_call.1} parent=11 // pred_check
          %p414 = pneg %p230
        $region38: #{tpu_custom_call.1} parent=11 // pred_check_branch
          %416 = sbr.rel (%p414) target = $region40
        $region39: #{tpu_custom_call.1} parent=11 // pred_region
          %s418 = ssub.s32 2048, 2048
          %419 = vsyncadd [#allocation9], %s418
          %s420 = sshll.u32 [#allocation10], 4
          %s421 = int_to_ptr.vmem [resolvable:$true] %s420
          %426 = dma.hbm_to_vmem [thread:$0]  %s8, 2048, %s421, [#allocation9], 128, 128, 8
        $region40: #{tpu_custom_call.1} parent=11 // pred_fallthru
          _
        // Predicated region
        $region41: #{tpu_custom_call.1} parent=11 // pred_check
          %p427 = pneg %p251
        $region42: #{tpu_custom_call.1} parent=11 // pred_check_branch
          %429 = sbr.rel (%p427) target = $region44
        $region43: #{tpu_custom_call.1} parent=11 // pred_region
          _
        $region44: #{tpu_custom_call.1} parent=11 // pred_fallthru
          _
        // Predicated region
        $region45: #{tpu_custom_call.1} parent=11 // pred_check
          %p430 = pneg %p272
        $region46: #{tpu_custom_call.1} parent=11 // pred_check_branch
          %432 = sbr.rel (%p430) target = $region48
        $region47: #{tpu_custom_call.1} parent=11 // pred_region
          %s434 = ssub.s32 2048, 2048
          %435 = vsyncadd [#allocation12], %s434
          %s436 = sshll.u32 [#allocation11], 4
          %s437 = int_to_ptr.vmem [resolvable:$true] %s436
          %442 = dma.hbm_to_vmem [thread:$0]  %s10, 2048, %s437, [#allocation12], 64, 64, 4
        $region48: #{tpu_custom_call.1} parent=11 // pred_fallthru
          _
        // Predicated region
        $region49: #{tpu_custom_call.1} parent=11 // pred_check
          %p443 = pneg %p293
        $region50: #{tpu_custom_call.1} parent=11 // pred_check_branch
          %445 = sbr.rel (%p443) target = $region52
        $region51: #{tpu_custom_call.1} parent=11 // pred_region
          _
        $region52: #{tpu_custom_call.1} parent=11 // pred_fallthru
          _
        // Predicated region
        $region53: #{tpu_custom_call.1} parent=11 // pred_check
          %p446 = pneg %p314
        $region54: #{tpu_custom_call.1} parent=11 // pred_check_branch
          %448 = sbr.rel (%p446) target = $region56
        $region55: #{tpu_custom_call.1} parent=11 // pred_region
          _
        $region56: #{tpu_custom_call.1} parent=11 // pred_fallthru
          _
        // Predicated region
        $region57: #{tpu_custom_call.1} parent=11 // pred_check
          %p449 = pneg %p335
        $region58: #{tpu_custom_call.1} parent=11 // pred_check_branch
          %451 = sbr.rel (%p449) target = $region60
        $region59: #{tpu_custom_call.1} parent=11 // pred_region
          _
        $region60: #{tpu_custom_call.1} parent=11 // pred_fallthru
          _
      $region12: #{tpu_custom_call.1} parent=5 // pred_fallthru
        _
      %p452 = scmp.lt.s32.totalorder %s31, 2
      // Predicated region
      $region61: #{tpu_custom_call.1} parent=5 // pred_check
        %p453 = pneg %p452
      $region62: #{tpu_custom_call.1} parent=5 // pred_check_branch
        %455 = sbr.rel (%p453) target = $region64
      $region63: #{tpu_custom_call.1} parent=5 // pred_region
        // Predicated region
        $region65: #{tpu_custom_call.1} parent=63 // pred_check
          %p456 = pneg %p51
        $region66: #{tpu_custom_call.1} parent=63 // pred_check_branch
          %458 = sbr.rel (%p456) target = $region68
        $region67: #{tpu_custom_call.1} parent=63 // pred_region
          %s459 = sand.u32 %s41, 1
          %s460 = scalar_lea.sflag [#allocation3], %s459
          %s461 = sand.u32 %s41, 1
          %s462 = smul.addr %s461, 8
          %s463 = scalar_lea.vmem [#allocation2], %s462
          %s465 = ssub.s32 128, 128
          %466 = vsyncadd %s460, %s465
          %s467 = smul.addr %s31, 128
          %s468 = scalar_lea.hbm %s0, %s467
          %s470 = sshll.u32 %s463, 4
          %s471 = int_to_ptr.vmem [resolvable:$true] %s470
          %473 = dma.hbm_to_vmem [thread:$0]  %s468, 128, %s471, %s460
        $region68: #{tpu_custom_call.1} parent=63 // pred_fallthru
          _
        // Predicated region
        $region69: #{tpu_custom_call.1} parent=63 // pred_check
          %p474 = pneg %p77
        $region70: #{tpu_custom_call.1} parent=63 // pred_check_branch
          %476 = sbr.rel (%p474) target = $region72
        $region71: #{tpu_custom_call.1} parent=63 // pred_region
          %s477 = sand.u32 %s31, 1
          %s478 = scalar_lea.sflag [#allocation6], %s477
          %s479 = sand.u32 %s67, 1
          %s480 = scalar_lea.vmem [#allocation5], %s479
          %s482 = ssub.s32 16, 16
          %483 = vsyncadd %s478, %s482
          %s484 = smul.addr %s31, 16
          %s485 = scalar_lea.hbm %s1, %s484
          %s487 = sshll.u32 %s480, 4
          %s488 = int_to_ptr.vmem [resolvable:$true] %s487
          %490 = dma.hbm_to_vmem [thread:$0]  %s485, 16, %s488, %s478
        $region72: #{tpu_custom_call.1} parent=63 // pred_fallthru
          _
      $region64: #{tpu_custom_call.1} parent=5 // pred_fallthru
        _
      %p491 = scmp.le.s32.totalorder 1, %s31
      %p492 = scmp.lt.s32.totalorder %s31, 3
      %p493 = pnand %p491, %p492
      %p494 = pneg %p493
      // Predicated region
      $region73: #{tpu_custom_call.1} parent=5 // pred_check
        _
      $region74: #{tpu_custom_call.1} parent=5 // pred_check_branch
        %496 = sbr.rel (%p493) target = $region76
      $region75: #{tpu_custom_call.1} parent=5 // pred_region
        %s497 = ssub.s32 %s31, 1
        %s498 = sand.u32 %s44, 1
        %s499 = scalar_lea.sflag [#allocation3], %s498
        %s500 = sand.u32 %s44, 1
        %s501 = smul.addr %s500, 8
        %s502 = scalar_lea.vmem [#allocation2], %s501
        // Predicated region
        $region77: #{tpu_custom_call.1} parent=75 // pred_check
          %p503 = pneg %p57
        $region78: #{tpu_custom_call.1} parent=75 // pred_check_branch
          %505 = sbr.rel (%p503) target = $region80
        $region79: #{tpu_custom_call.1} parent=75 // pred_region
          %506 = dma.done %s499, 128
        $region80: #{tpu_custom_call.1} parent=75 // pred_fallthru
          _
        %s507 = sand.u32 %s36, 1
        %s508 = scalar_lea.sflag [#allocation6], %s507
        %s509 = sand.u32 %s70, 1
        %s510 = scalar_lea.vmem [#allocation5], %s509
        // Predicated region
        $region81: #{tpu_custom_call.1} parent=75 // pred_check
          %p511 = pneg %p83
        $region82: #{tpu_custom_call.1} parent=75 // pred_check_branch
          %513 = sbr.rel (%p511) target = $region84
        $region83: #{tpu_custom_call.1} parent=75 // pred_region
          %514 = dma.done %s508, 16
        $region84: #{tpu_custom_call.1} parent=75 // pred_fallthru
          _
        // Predicated region
        $region85: #{tpu_custom_call.1} parent=75 // pred_check
          %p515 = pneg %p104
        $region86: #{tpu_custom_call.1} parent=75 // pred_check_branch
          %517 = sbr.rel (%p515) target = $region88
        $region87: #{tpu_custom_call.1} parent=75 // pred_region
          %518 = dma.done [#allocation6], 3072
        $region88: #{tpu_custom_call.1} parent=75 // pred_fallthru
          _
        // Predicated region
        $region89: #{tpu_custom_call.1} parent=75 // pred_check
          %p519 = pneg %p146
        $region90: #{tpu_custom_call.1} parent=75 // pred_check_branch
          %521 = sbr.rel (%p519) target = $region92
        $region91: #{tpu_custom_call.1} parent=75 // pred_region
          %522 = dma.done [#allocation9], 1024
        $region92: #{tpu_custom_call.1} parent=75 // pred_fallthru
          _
        // Predicated region
        $region93: #{tpu_custom_call.1} parent=75 // pred_check
          %p523 = pneg %p230
        $region94: #{tpu_custom_call.1} parent=75 // pred_check_branch
          %525 = sbr.rel (%p523) target = $region96
        $region95: #{tpu_custom_call.1} parent=75 // pred_region
          %526 = dma.done [#allocation9], 2048
        $region96: #{tpu_custom_call.1} parent=75 // pred_fallthru
          _
        // Predicated region
        $region97: #{tpu_custom_call.1} parent=75 // pred_check
          %p527 = pneg %p272
        $region98: #{tpu_custom_call.1} parent=75 // pred_check_branch
          %529 = sbr.rel (%p527) target = $region100
        $region99: #{tpu_custom_call.1} parent=75 // pred_region
          %530 = dma.done [#allocation12], 2048
        $region100: #{tpu_custom_call.1} parent=75 // pred_fallthru
          _
        %s531 = sand.u32 %s44, 1
        %s532 = scalar_lea.sflag [#allocation3], %s531
        %s533 = sand.u32 %s44, 1
        %s534 = smul.addr %s533, 8
        %s535 = scalar_lea.vmem [#allocation2], %s534
        %p536 = pneg %p57
        %p537 = pneg %p54
        %s538 = sand.u32 %s36, 1
        %s539 = scalar_lea.sflag [#allocation6], %s538
        %s540 = sand.u32 %s70, 1
        %s541 = scalar_lea.vmem [#allocation5], %s540
        %p542 = pneg %p83
        %p543 = pneg %p80
        %p544 = pneg %p104
        %p545 = pneg %p101
        %p546 = pneg %p125
        %p547 = pneg %p122
        %p548 = pneg %p146
        %p549 = pneg %p143
        %p550 = pneg %p167
        %p551 = pneg %p164
        %p552 = pneg %p188
        %p553 = pneg %p185
        %p554 = pneg %p209
        %p555 = pneg %p206
        %p556 = pneg %p230
        %p557 = pneg %p227
        %p558 = pneg %p251
        %p559 = pneg %p248
        %p560 = pneg %p272
        %p561 = pneg %p269
        %p562 = pneg %p293
        %p563 = pneg %p290
        %p564 = pneg %p314
        %p565 = pneg %p311
        %p566 = pneg %p335
        %p567 = pneg %p332
        %p568 = pneg %p361
        %p569 = pneg %p358
        %s570 = sand.u32 %s348, 1
        %s571 = scalar_lea.sflag [#allocation4], %s570
        %s572 = sand.u32 %s348, 1
        %s573 = smul.addr %s572, 8
        %s574 = scalar_lea.vmem [#allocation13], %s573
        %v576 = vld [vmem:[%s502] sm:$0xff]
        %v577 = vld [vmem:[%s510] sm:$0x1]
        %v578 = vpack.c.bf16 %v576, %v576
        %v579 = vld [vmem:[#allocation7] sm:$0xff]
        %v580 = vld [vmem:[#allocation7 + $0x8] sm:$0xf]
        %v581 = vld [vmem:[#allocation7 + $0xc] sm:$0xff]
        %v582 = vld [vmem:[#allocation7 + $0x14] sm:$0xf]
        %v583 = vld [vmem:[#allocation7 + $0x18] sm:$0xff]
        %v584 = vld [vmem:[#allocation7 + $0x20] sm:$0xf]
        %v585 = vld [vmem:[#allocation7 + $0x24] sm:$0xff]
        %v586 = vld [vmem:[#allocation7 + $0x2c] sm:$0xf]
        %v587 = vld [vmem:[#allocation7 + $0x30] sm:$0xff]
        %v588 = vld [vmem:[#allocation7 + $0x38] sm:$0xf]
        %v589 = vld [vmem:[#allocation7 + $0x3c] sm:$0xff]
        %v590 = vld [vmem:[#allocation7 + $0x44] sm:$0xf]
        %v591 = vld [vmem:[#allocation7 + $0x48] sm:$0xff]
        %v592 = vld [vmem:[#allocation7 + $0x50] sm:$0xf]
        %v593 = vld [vmem:[#allocation7 + $0x54] sm:$0xff]
        %v594 = vld [vmem:[#allocation7 + $0x5c] sm:$0xf]
        %v595 = vld [vmem:[#allocation7 + $0x60] sm:$0xff]
        %v596 = vld [vmem:[#allocation7 + $0x68] sm:$0xf]
        %v597 = vld [vmem:[#allocation7 + $0x6c] sm:$0xff]
        %v598 = vld [vmem:[#allocation7 + $0x74] sm:$0xf]
        %v599 = vld [vmem:[#allocation7 + $0x78] sm:$0xff]
        %v600 = vld [vmem:[#allocation7 + $0x80] sm:$0xf]
        %v601 = vld [vmem:[#allocation7 + $0x84] sm:$0xff]
        %v602 = vld [vmem:[#allocation7 + $0x8c] sm:$0xf]
        %v603 = vld [vmem:[#allocation7 + $0x90] sm:$0xff]
        %v604 = vld [vmem:[#allocation7 + $0x98] sm:$0xf]
        %v605 = vld [vmem:[#allocation7 + $0x9c] sm:$0xff]
        %v606 = vld [vmem:[#allocation7 + $0xa4] sm:$0xf]
        %v607 = vld [vmem:[#allocation7 + $0xa8] sm:$0xff]
        %v608 = vld [vmem:[#allocation7 + $0xb0] sm:$0xf]
        %v609 = vld [vmem:[#allocation7 + $0xb4] sm:$0xff]
        %v610 = vld [vmem:[#allocation7 + $0xbc] sm:$0xf]
        %v611 = vld [vmem:[%s3] sm:$0x7]
        %v613 = vlaneseq
        %v614 = vshrl.u32 %v613, 7
        %v615 = vsub.s32 0, %v614
        %v616 = vrot.slane %v611, %v615
        %v617 = vlaneseq
        %v618 = vshrl.u32 %v617, 7
        %v619 = vsub.s32 1, %v618
        %v620 = vrot.slane %v611, %v619
        %v621 = vlaneseq
        %v622 = vshrl.u32 %v621, 7
        %v623 = vsub.s32 2, %v622
        %v624 = vrot.slane %v611, %v623
        %v660 = vunpack.c.l.b16 %v579
        %v661 = vunpack.c.h.b16 %v579
        %v662 = vunpack.c.l.b16 %v580
        %v663 = vunpack.c.l.b16 %v581
        %v664 = vunpack.c.h.b16 %v581
        %v665 = vunpack.c.l.b16 %v582
        %v666 = vunpack.c.l.b16 %v583
        %v667 = vunpack.c.h.b16 %v583
        %v668 = vunpack.c.l.b16 %v584
        %v669 = vunpack.c.l.b16 %v585
        %v670 = vunpack.c.h.b16 %v585
        %v671 = vunpack.c.l.b16 %v586
        %v672 = vunpack.c.l.b16 %v587
        %v673 = vunpack.c.h.b16 %v587
        %v674 = vunpack.c.l.b16 %v588
        %v675 = vunpack.c.l.b16 %v589
        %v676 = vunpack.c.h.b16 %v589
        %v677 = vunpack.c.l.b16 %v590
        %v678 = vunpack.c.l.b16 %v591
        %v679 = vunpack.c.h.b16 %v591
        %v680 = vunpack.c.l.b16 %v592
        %v681 = vunpack.c.l.b16 %v593
        %v682 = vunpack.c.h.b16 %v593
        %v683 = vunpack.c.l.b16 %v594
        %v684 = vunpack.c.l.b16 %v595
        %v685 = vunpack.c.h.b16 %v595
        %v686 = vunpack.c.l.b16 %v596
        %v687 = vunpack.c.l.b16 %v597
        %v688 = vunpack.c.h.b16 %v597
        %v689 = vunpack.c.l.b16 %v598
        %v690 = vunpack.c.l.b16 %v599
        %v691 = vunpack.c.h.b16 %v599
        %v692 = vunpack.c.l.b16 %v600
        %v693 = vunpack.c.l.b16 %v601
        %v694 = vunpack.c.h.b16 %v601
        %v695 = vunpack.c.l.b16 %v602
        %v696 = vunpack.c.l.b16 %v603
        %v697 = vunpack.c.h.b16 %v603
        %v698 = vunpack.c.l.b16 %v604
        %v699 = vunpack.c.l.b16 %v605
        %v700 = vunpack.c.h.b16 %v605
        %v701 = vunpack.c.l.b16 %v606
        %v702 = vunpack.c.l.b16 %v607
        %v703 = vunpack.c.h.b16 %v607
        %v704 = vunpack.c.l.b16 %v608
        %v705 = vunpack.c.l.b16 %v609
        %v706 = vunpack.c.h.b16 %v609
        %v707 = vunpack.c.l.b16 %v610
        %v708 = vpack.c.b16 %v663, %v660
        %v709 = vpack.c.b16 %v664, %v661
        %v710 = vpack.c.b16 %v665, %v662
        %v711 = vpack.c.b16 %v669, %v666
        %v712 = vpack.c.b16 %v670, %v667
        %v713 = vpack.c.b16 %v671, %v668
        %v714 = vpack.c.b16 %v675, %v672
        %v715 = vpack.c.b16 %v676, %v673
        %v716 = vpack.c.b16 %v677, %v674
        %v717 = vpack.c.b16 %v681, %v678
        %v718 = vpack.c.b16 %v682, %v679
        %v719 = vpack.c.b16 %v683, %v680
        %v720 = vpack.c.b16 %v687, %v684
        %v721 = vpack.c.b16 %v688, %v685
        %v722 = vpack.c.b16 %v689, %v686
        %v723 = vpack.c.b16 %v693, %v690
        %v724 = vpack.c.b16 %v694, %v691
        %v725 = vpack.c.b16 %v695, %v692
        %v726 = vpack.c.b16 %v699, %v696
        %v727 = vpack.c.b16 %v700, %v697
        %v728 = vpack.c.b16 %v701, %v698
        %v729 = vpack.c.b16 %v705, %v702
        %v730 = vpack.c.b16 %v706, %v703
        %v731 = vpack.c.b16 %v707, %v704
        %756 = vmatprep.subr.bf16.mxu0 %v730
        %757 = vmatpush1.bf16.msra.mxu0 %v729
        %758 = vmatprep.subr.bf16.mxu0 %v727
        %759 = vmatpush1.bf16.msra.mxu0 %v726
        %760 = vmatprep.subr.bf16.mxu0 %v724
        %761 = vmatpush1.bf16.msra.mxu0 %v723
        %762 = vmatprep.subr.bf16.mxu0 %v721
        %763 = vmatpush1.bf16.msra.mxu0 %v720
        %764 = vmatprep.subr.bf16.mxu0 %v718
        %765 = vmatpush1.bf16.msra.mxu0 %v717
        %766 = vmatprep.subr.bf16.mxu0 %v715
        %767 = vmatpush1.bf16.msra.mxu0 %v714
        %768 = vmatprep.subr.bf16.mxu0 %v712
        %769 = vmatpush1.bf16.msra.mxu0 %v711
        %770 = vmatprep.subr.bf16.mxu0 %v709
        %771 = vmatpush1.bf16.msra.mxu0 %v708
        %772 = vmatprep.subr.bf16.mxu0 0
        %773 = vmatpush2.bf16.msra.mxu0 0
        %774 = vmatprep.subr.bf16.mxu0 0
        %775 = vmatpush2.bf16.msra.mxu0 0
        %776 = vmatprep.subr.bf16.mxu0 0
        %777 = vmatpush2.bf16.msra.mxu0 0
        %778 = vmatprep.subr.bf16.mxu0 0
        %779 = vmatpush2.bf16.msra.mxu0 0
        %780 = vmatprep.subr.bf16.mxu0 0
        %781 = vmatpush2.bf16.msra.mxu0 0
        %782 = vmatprep.subr.bf16.mxu0 0
        %783 = vmatpush2.bf16.msra.mxu0 0
        %784 = vmatprep.subr.bf16.mxu0 0
        %785 = vmatpush2.bf16.msra.mxu0 0
        %786 = vmatprep.subr.bf16.mxu0 0
        %787 = vmatpush2.bf16.msra.mxu0 0
        %788 = vmatprep.mubr.bf16.mxu0 0
        %789 = vmatmul.mubr.bf16.gmra.mxu0 %v578
        %v790 = vpop.f32.mrf.mxu0
        %v791 = vadd.f32 %v616, %v790
        %v792 = vpop.f32.mrf.mxu0
        %v793 = vadd.f32 %v620, %v792
        %v794 = vpop.f32.mrf.mxu0
        %v795 = vpop.f32.mrf.mxu0
        %796 = vdwg.mxu0
        %797 = vmatprep.subr.bf16.mxu0 0
        %798 = vmatpush1.bf16.msra.mxu0 %v731
        %799 = vmatprep.subr.bf16.mxu0 0
        %800 = vmatpush1.bf16.msra.mxu0 %v728
        %801 = vmatprep.subr.bf16.mxu0 0
        %802 = vmatpush1.bf16.msra.mxu0 %v725
        %803 = vmatprep.subr.bf16.mxu0 0
        %804 = vmatpush1.bf16.msra.mxu0 %v722
        %805 = vmatprep.subr.bf16.mxu0 0
        %806 = vmatpush1.bf16.msra.mxu0 %v719
        %807 = vmatprep.subr.bf16.mxu0 0
        %808 = vmatpush1.bf16.msra.mxu0 %v716
        %809 = vmatprep.subr.bf16.mxu0 0
        %810 = vmatpush1.bf16.msra.mxu0 %v713
        %811 = vmatprep.subr.bf16.mxu0 0
        %812 = vmatpush1.bf16.msra.mxu0 %v710
        %813 = vmatprep.subr.bf16.mxu0 0
        %814 = vmatpush2.bf16.msra.mxu0 0
        %815 = vmatprep.subr.bf16.mxu0 0
        %816 = vmatpush2.bf16.msra.mxu0 0
        %817 = vmatprep.subr.bf16.mxu0 0
        %818 = vmatpush2.bf16.msra.mxu0 0
        %819 = vmatprep.subr.bf16.mxu0 0
        %820 = vmatpush2.bf16.msra.mxu0 0
        %821 = vmatprep.subr.bf16.mxu0 0
        %822 = vmatpush2.bf16.msra.mxu0 0
        %823 = vmatprep.subr.bf16.mxu0 0
        %824 = vmatpush2.bf16.msra.mxu0 0
        %825 = vmatprep.subr.bf16.mxu0 0
        %826 = vmatpush2.bf16.msra.mxu0 0
        %827 = vmatprep.subr.bf16.mxu0 0
        %828 = vmatpush2.bf16.msra.mxu0 0
        %829 = vmatprep.mubr.bf16.mxu0 0
        %830 = vmatmul.mubr.bf16.gmra.mxu0 %v578
        %v831 = vpop.f32.mrf.mxu0
        %v832 = vadd.f32 %v624, %v831
        %v833 = vpop.f32.mrf.mxu0
        %v834 = vpop.f32.mrf.mxu0
        %v835 = vpop.f32.mrf.mxu0
        %836 = vdwg.mxu0
        %v837 = vpack.c.bf16 %v791, %v791
        %v838 = vpack.c.bf16 %v793, %v793
        %v839 = vpack.c.bf16 %v832, %v832
        %v841 = vlaneseq
        %v842 = vshrl.u32 %v841, 7
        %v843 = vsub.s32 0, %v842
        %v844 = vrot.slane %v577, %v843
        %vm846 = vcmask 261120
        %v848 = vsel %vm846, %v837, 0
        %v851 = vsel %vm846, %v838, 0
        %853 = vmatprep.subr.bf16.mxu0 0
        %854 = vmatpush1.bf16.xpose.msra.mxu0 0
        %855 = vmatprep.subr.bf16.mxu0 0
        %856 = vmatpush1.bf16.xpose.msra.mxu0 0
        %857 = vmatprep.subr.bf16.mxu0 0
        %858 = vmatpush1.bf16.xpose.msra.mxu0 0
        %859 = vmatprep.subr.bf16.mxu0 0
        %860 = vmatpush1.bf16.xpose.msra.mxu0 0
        %861 = vmatprep.subr.bf16.mxu0 0
        %862 = vmatpush1.bf16.xpose.msra.mxu0 0
        %863 = vmatprep.subr.bf16.mxu0 0
        %864 = vmatpush1.bf16.xpose.msra.mxu0 0
        %865 = vmatprep.subr.bf16.mxu0 0
        %866 = vmatpush1.bf16.xpose.msra.mxu0 0
        %867 = vmatprep.subr.bf16.mxu0 0
        %868 = vmatpush1.bf16.xpose.msra.mxu0 %v851
        %869 = vmatprep.subr.bf16.mxu0 0
        %870 = vmatpush2.bf16.xpose.msra.mxu0 0
        %871 = vmatprep.subr.bf16.mxu0 0
        %872 = vmatpush2.bf16.xpose.msra.mxu0 0
        %873 = vmatprep.subr.bf16.mxu0 0
        %874 = vmatpush2.bf16.xpose.msra.mxu0 0
        %875 = vmatprep.subr.bf16.mxu0 0
        %876 = vmatpush2.bf16.xpose.msra.mxu0 0
        %877 = vmatprep.subr.bf16.mxu0 0
        %878 = vmatpush2.bf16.xpose.msra.mxu0 0
        %879 = vmatprep.subr.bf16.mxu0 0
        %880 = vmatpush2.bf16.xpose.msra.mxu0 0
        %881 = vmatprep.subr.bf16.mxu0 0
        %882 = vmatpush2.bf16.xpose.msra.mxu0 0
        %883 = vmatprep.subr.bf16.mxu0 0
        %884 = vmatpush2.bf16.xpose.msra.mxu0 0
        %885 = vmatprep.mubr.bf16.mxu0 0
        %886 = vmatmul.mubr.bf16.gmra.mxu0 %v848
        %v887 = vpop.f32.mrf.mxu0
        %v888 = vadd.f32 %v844, %v887
        %v889 = vpop.f32.mrf.mxu0
        %v890 = vpop.f32.mrf.mxu0
        %v891 = vpop.f32.mrf.mxu0
        %892 = vdwg.mxu0
        %vm893 = vcmask 64512
        %v894 = vsel %vm893, %v888, -inf
        %895 = vmax.xlane.f32.xlu0 %v894
        %v896 = vpop.xlane.xlu0 %895
        %v897 = vsub.f32 %v888, %v896
        %v898 = vmul.f32 %v897, 1.442695
        %v899 = vpow.pop %v898
        %v900 = vsel %vm893, %v899, 0.0
        %901 = vadd.xlane.f32.xlu0 %v900
        %v902 = vpop.xlane.xlu0 %901
        %v903 = vrcp.pop %v902
        %v904 = vmul.f32 %v899, %v903
        %v905 = vpack.c.bf16 %v904, %v904
        %v907 = vsel %vm893, %v905, 0
        %vm909 = vcmask 1043456
        %v911 = vsel %vm909, %v839, 0
        %913 = vmatprep.subr.bf16.mxu0 0
        %914 = vmatpush1.bf16.msra.mxu0 0
        %915 = vmatprep.subr.bf16.mxu0 0
        %916 = vmatpush1.bf16.msra.mxu0 0
        %917 = vmatprep.subr.bf16.mxu0 0
        %918 = vmatpush1.bf16.msra.mxu0 0
        %919 = vmatprep.subr.bf16.mxu0 0
        %920 = vmatpush1.bf16.msra.mxu0 0
        %921 = vmatprep.subr.bf16.mxu0 0
        %922 = vmatpush1.bf16.msra.mxu0 0
        %923 = vmatprep.subr.bf16.mxu0 0
        %924 = vmatpush1.bf16.msra.mxu0 0
        %925 = vmatprep.subr.bf16.mxu0 0
        %926 = vmatpush1.bf16.msra.mxu0 0
        %927 = vmatprep.subr.bf16.mxu0 0
        %928 = vmatpush1.bf16.msra.mxu0 %v911
        %929 = vmatprep.subr.bf16.mxu0 0
        %930 = vmatpush2.bf16.msra.mxu0 0
        %931 = vmatprep.subr.bf16.mxu0 0
        %932 = vmatpush2.bf16.msra.mxu0 0
        %933 = vmatprep.subr.bf16.mxu0 0
        %934 = vmatpush2.bf16.msra.mxu0 0
        %935 = vmatprep.subr.bf16.mxu0 0
        %936 = vmatpush2.bf16.msra.mxu0 0
        %937 = vmatprep.subr.bf16.mxu0 0
        %938 = vmatpush2.bf16.msra.mxu0 0
        %939 = vmatprep.subr.bf16.mxu0 0
        %940 = vmatpush2.bf16.msra.mxu0 0
        %941 = vmatprep.subr.bf16.mxu0 0
        %942 = vmatpush2.bf16.msra.mxu0 0
        %943 = vmatprep.subr.bf16.mxu0 0
        %944 = vmatpush2.bf16.msra.mxu0 0
        %945 = vmatprep.mubr.bf16.mxu0 0
        %946 = vmatmul.mubr.bf16.gmra.mxu0 %v907
        %v947 = vpop.f32.mrf.mxu0
        %v948 = vadd.f32 0.0, %v947
        %v949 = vpop.f32.mrf.mxu0
        %v950 = vpop.f32.mrf.mxu0
        %v951 = vpop.f32.mrf.mxu0
        %952 = vdwg.mxu0
        %v953 = vpack.c.bf16 %v948, %v948
        %v954 = vld [vmem:[#allocation8] sm:$0xf]
        %v955 = vld [vmem:[#allocation8 + $0x4] sm:$0xf]
        %v956 = vld [vmem:[#allocation8 + $0x8] sm:$0xf]
        %v957 = vld [vmem:[#allocation8 + $0xc] sm:$0xf]
        %959 = vrot.lane.b32.xlu0 %v837, 96
        %v960 = vpop.permute.xlu0 %959
        %962 = vrot.lane.b32.xlu0 %v838, 96
        %v963 = vpop.permute.xlu0 %962
        %v965 = vsel %vm846, %v960, 0
        %v968 = vsel %vm846, %v963, 0
        %970 = vmatprep.subr.bf16.mxu0 0
        %971 = vmatpush1.bf16.xpose.msra.mxu0 0
        %972 = vmatprep.subr.bf16.mxu0 0
        %973 = vmatpush1.bf16.xpose.msra.mxu0 0
        %974 = vmatprep.subr.bf16.mxu0 0
        %975 = vmatpush1.bf16.xpose.msra.mxu0 0
        %976 = vmatprep.subr.bf16.mxu0 0
        %977 = vmatpush1.bf16.xpose.msra.mxu0 0
        %978 = vmatprep.subr.bf16.mxu0 0
        %979 = vmatpush1.bf16.xpose.msra.mxu0 0
        %980 = vmatprep.subr.bf16.mxu0 0
        %981 = vmatpush1.bf16.xpose.msra.mxu0 0
        %982 = vmatprep.subr.bf16.mxu0 0
        %983 = vmatpush1.bf16.xpose.msra.mxu0 0
        %984 = vmatprep.subr.bf16.mxu0 0
        %985 = vmatpush1.bf16.xpose.msra.mxu0 %v968
        %986 = vmatprep.subr.bf16.mxu0 0
        %987 = vmatpush2.bf16.xpose.msra.mxu0 0
        %988 = vmatprep.subr.bf16.mxu0 0
        %989 = vmatpush2.bf16.xpose.msra.mxu0 0
        %990 = vmatprep.subr.bf16.mxu0 0
        %991 = vmatpush2.bf16.xpose.msra.mxu0 0
        %992 = vmatprep.subr.bf16.mxu0 0
        %993 = vmatpush2.bf16.xpose.msra.mxu0 0
        %994 = vmatprep.subr.bf16.mxu0 0
        %995 = vmatpush2.bf16.xpose.msra.mxu0 0
        %996 = vmatprep.subr.bf16.mxu0 0
        %997 = vmatpush2.bf16.xpose.msra.mxu0 0
        %998 = vmatprep.subr.bf16.mxu0 0
        %999 = vmatpush2.bf16.xpose.msra.mxu0 0
        %1000 = vmatprep.subr.bf16.mxu0 0
        %1001 = vmatpush2.bf16.xpose.msra.mxu0 0
        %1002 = vmatprep.mubr.bf16.mxu0 0
        %1003 = vmatmul.mubr.bf16.gmra.mxu0 %v965
        %v1004 = vpop.f32.mrf.mxu0
        %v1005 = vadd.f32 %v844, %v1004
        %v1006 = vpop.f32.mrf.mxu0
        %v1007 = vpop.f32.mrf.mxu0
        %v1008 = vpop.f32.mrf.mxu0
        %1009 = vdwg.mxu0
        %v1010 = vsel %vm893, %v1005, -inf
        %1011 = vmax.xlane.f32.xlu0 %v1010
        %v1012 = vpop.xlane.xlu0 %1011
        %v1013 = vsub.f32 %v1005, %v1012
        %v1014 = vmul.f32 %v1013, 1.442695
        %v1015 = vpow.pop %v1014
        %v1016 = vsel %vm893, %v1015, 0.0
        %1017 = vadd.xlane.f32.xlu0 %v1016
        %v1018 = vpop.xlane.xlu0 %1017
        %v1019 = vrcp.pop %v1018
        %v1020 = vmul.f32 %v1015, %v1019
        %v1021 = vpack.c.bf16 %v1020, %v1020
        %1023 = vrot.lane.b32.xlu0 %v839, 96
        %v1024 = vpop.permute.xlu0 %1023
        %v1026 = vsel %vm893, %v1021, 0
        %v1029 = vsel %vm909, %v1024, 0
        %1031 = vmatprep.subr.bf16.mxu0 0
        %1032 = vmatpush1.bf16.msra.mxu0 0
        %1033 = vmatprep.subr.bf16.mxu0 0
        %1034 = vmatpush1.bf16.msra.mxu0 0
        %1035 = vmatprep.subr.bf16.mxu0 0
        %1036 = vmatpush1.bf16.msra.mxu0 0
        %1037 = vmatprep.subr.bf16.mxu0 0
        %1038 = vmatpush1.bf16.msra.mxu0 0
        %1039 = vmatprep.subr.bf16.mxu0 0
        %1040 = vmatpush1.bf16.msra.mxu0 0
        %1041 = vmatprep.subr.bf16.mxu0 0
        %1042 = vmatpush1.bf16.msra.mxu0 0
        %1043 = vmatprep.subr.bf16.mxu0 0
        %1044 = vmatpush1.bf16.msra.mxu0 0
        %1045 = vmatprep.subr.bf16.mxu0 0
        %1046 = vmatpush1.bf16.msra.mxu0 %v1029
        %1047 = vmatprep.subr.bf16.mxu0 0
        %1048 = vmatpush2.bf16.msra.mxu0 0
        %1049 = vmatprep.subr.bf16.mxu0 0
        %1050 = vmatpush2.bf16.msra.mxu0 0
        %1051 = vmatprep.subr.bf16.mxu0 0
        %1052 = vmatpush2.bf16.msra.mxu0 0
        %1053 = vmatprep.subr.bf16.mxu0 0
        %1054 = vmatpush2.bf16.msra.mxu0 0
        %1055 = vmatprep.subr.bf16.mxu0 0
        %1056 = vmatpush2.bf16.msra.mxu0 0
        %1057 = vmatprep.subr.bf16.mxu0 0
        %1058 = vmatpush2.bf16.msra.mxu0 0
        %1059 = vmatprep.subr.bf16.mxu0 0
        %1060 = vmatpush2.bf16.msra.mxu0 0
        %1061 = vmatprep.subr.bf16.mxu0 0
        %1062 = vmatpush2.bf16.msra.mxu0 0
        %1063 = vmatprep.mubr.bf16.mxu0 0
        %1064 = vmatmul.mubr.bf16.gmra.mxu0 %v1026
        %v1065 = vpop.f32.mrf.mxu0
        %v1066 = vadd.f32 0.0, %v1065
        %v1067 = vpop.f32.mrf.mxu0
        %v1068 = vpop.f32.mrf.mxu0
        %v1069 = vpop.f32.mrf.mxu0
        %1070 = vdwg.mxu0
        %v1071 = vpack.c.bf16 %v1066, %v1066
        %v1072 = vld [vmem:[#allocation8 + $0x10] sm:$0xf]
        %v1073 = vld [vmem:[#allocation8 + $0x14] sm:$0xf]
        %v1074 = vld [vmem:[#allocation8 + $0x18] sm:$0xf]
        %v1075 = vld [vmem:[#allocation8 + $0x1c] sm:$0xf]
        %v1080 = vunpack.c.l.b16 %v1072
        %v1081 = vunpack.c.l.b16 %v1073
        %v1082 = vunpack.c.l.b16 %v1074
        %v1083 = vunpack.c.l.b16 %v1075
        %v1084 = vpack.c.b16 %v1081, %v1080
        %v1085 = vpack.c.b16 %v1083, %v1082
        %v1089 = vsel %vm846, %v1071, 0
        %1091 = vmatprep.subr.bf16.mxu0 0
        %1092 = vmatpush1.bf16.msra.mxu0 0
        %1093 = vmatprep.subr.bf16.mxu0 0
        %1094 = vmatpush1.bf16.msra.mxu0 0
        %1095 = vmatprep.subr.bf16.mxu0 0
        %1096 = vmatpush1.bf16.msra.mxu0 0
        %1097 = vmatprep.subr.bf16.mxu0 0
        %1098 = vmatpush1.bf16.msra.mxu0 0
        %1099 = vmatprep.subr.bf16.mxu0 0
        %1100 = vmatpush1.bf16.msra.mxu0 0
        %1101 = vmatprep.subr.bf16.mxu0 0
        %1102 = vmatpush1.bf16.msra.mxu0 0
        %1103 = vmatprep.subr.bf16.mxu0 0
        %1104 = vmatpush1.bf16.msra.mxu0 %v1085
        %1105 = vmatprep.subr.bf16.mxu0 0
        %1106 = vmatpush1.bf16.msra.mxu0 %v1084
        %1107 = vmatprep.subr.bf16.mxu0 0
        %1108 = vmatpush2.bf16.msra.mxu0 0
        %1109 = vmatprep.subr.bf16.mxu0 0
        %1110 = vmatpush2.bf16.msra.mxu0 0
        %1111 = vmatprep.subr.bf16.mxu0 0
        %1112 = vmatpush2.bf16.msra.mxu0 0
        %1113 = vmatprep.subr.bf16.mxu0 0
        %1114 = vmatpush2.bf16.msra.mxu0 0
        %1115 = vmatprep.subr.bf16.mxu0 0
        %1116 = vmatpush2.bf16.msra.mxu0 0
        %1117 = vmatprep.subr.bf16.mxu0 0
        %1118 = vmatpush2.bf16.msra.mxu0 0
        %1119 = vmatprep.subr.bf16.mxu0 0
        %1120 = vmatpush2.bf16.msra.mxu0 0
        %1121 = vmatprep.subr.bf16.mxu0 0
        %1122 = vmatpush2.bf16.msra.mxu0 0
        %1123 = vmatprep.mubr.bf16.mxu0 0
        %1124 = vmatmul.mubr.bf16.gmra.mxu0 %v1089
        %v1125 = vpop.f32.mrf.mxu0
        %v1126 = vadd.f32 0.0, %v1125
        %v1127 = vpop.f32.mrf.mxu0
        %v1128 = vpop.f32.mrf.mxu0
        %v1129 = vpop.f32.mrf.mxu0
        %1130 = vdwg.mxu0
        %v1135 = vunpack.c.l.b16 %v954
        %v1136 = vunpack.c.l.b16 %v955
        %v1137 = vunpack.c.l.b16 %v956
        %v1138 = vunpack.c.l.b16 %v957
        %v1139 = vpack.c.b16 %v1136, %v1135
        %v1140 = vpack.c.b16 %v1138, %v1137
        %v1144 = vsel %vm846, %v953, 0
        %1146 = vmatprep.subr.bf16.mxu0 0
        %1147 = vmatpush1.bf16.msra.mxu0 0
        %1148 = vmatprep.subr.bf16.mxu0 0
        %1149 = vmatpush1.bf16.msra.mxu0 0
        %1150 = vmatprep.subr.bf16.mxu0 0
        %1151 = vmatpush1.bf16.msra.mxu0 0
        %1152 = vmatprep.subr.bf16.mxu0 0
        %1153 = vmatpush1.bf16.msra.mxu0 0
        %1154 = vmatprep.subr.bf16.mxu0 0
        %1155 = vmatpush1.bf16.msra.mxu0 0
        %1156 = vmatprep.subr.bf16.mxu0 0
        %1157 = vmatpush1.bf16.msra.mxu0 0
        %1158 = vmatprep.subr.bf16.mxu0 0
        %1159 = vmatpush1.bf16.msra.mxu0 %v1140
        %1160 = vmatprep.subr.bf16.mxu0 0
        %1161 = vmatpush1.bf16.msra.mxu0 %v1139
        %1162 = vmatprep.subr.bf16.mxu0 0
        %1163 = vmatpush2.bf16.msra.mxu0 0
        %1164 = vmatprep.subr.bf16.mxu0 0
        %1165 = vmatpush2.bf16.msra.mxu0 0
        %1166 = vmatprep.subr.bf16.mxu0 0
        %1167 = vmatpush2.bf16.msra.mxu0 0
        %1168 = vmatprep.subr.bf16.mxu0 0
        %1169 = vmatpush2.bf16.msra.mxu0 0
        %1170 = vmatprep.subr.bf16.mxu0 0
        %1171 = vmatpush2.bf16.msra.mxu0 0
        %1172 = vmatprep.subr.bf16.mxu0 0
        %1173 = vmatpush2.bf16.msra.mxu0 0
        %1174 = vmatprep.subr.bf16.mxu0 0
        %1175 = vmatpush2.bf16.msra.mxu0 0
        %1176 = vmatprep.subr.bf16.mxu0 0
        %1177 = vmatpush2.bf16.msra.mxu0 0
        %1178 = vmatprep.mubr.bf16.mxu0 0
        %1179 = vmatmul.mubr.bf16.gmra.mxu0 %v1144
        %v1180 = vpop.f32.mrf.mxu0
        %v1181 = vadd.f32 %v1126, %v1180
        %v1182 = vpop.f32.mrf.mxu0
        %v1183 = vpop.f32.mrf.mxu0
        %v1184 = vpop.f32.mrf.mxu0
        %1185 = vdwg.mxu0
        %1186 = vrot.lane.b32.xlu0 %v837, 64
        %v1187 = vpop.permute.xlu0 %1186
        %1188 = vrot.lane.b32.xlu0 %v838, 64
        %v1189 = vpop.permute.xlu0 %1188
        %v1191 = vsel %vm846, %v1187, 0
        %v1194 = vsel %vm846, %v1189, 0
        %1196 = vmatprep.subr.bf16.mxu0 0
        %1197 = vmatpush1.bf16.xpose.msra.mxu0 0
        %1198 = vmatprep.subr.bf16.mxu0 0
        %1199 = vmatpush1.bf16.xpose.msra.mxu0 0
        %1200 = vmatprep.subr.bf16.mxu0 0
        %1201 = vmatpush1.bf16.xpose.msra.mxu0 0
        %1202 = vmatprep.subr.bf16.mxu0 0
        %1203 = vmatpush1.bf16.xpose.msra.mxu0 0
        %1204 = vmatprep.subr.bf16.mxu0 0
        %1205 = vmatpush1.bf16.xpose.msra.mxu0 0
        %1206 = vmatprep.subr.bf16.mxu0 0
        %1207 = vmatpush1.bf16.xpose.msra.mxu0 0
        %1208 = vmatprep.subr.bf16.mxu0 0
        %1209 = vmatpush1.bf16.xpose.msra.mxu0 0
        %1210 = vmatprep.subr.bf16.mxu0 0
        %1211 = vmatpush1.bf16.xpose.msra.mxu0 %v1194
        %1212 = vmatprep.subr.bf16.mxu0 0
        %1213 = vmatpush2.bf16.xpose.msra.mxu0 0
        %1214 = vmatprep.subr.bf16.mxu0 0
        %1215 = vmatpush2.bf16.xpose.msra.mxu0 0
        %1216 = vmatprep.subr.bf16.mxu0 0
        %1217 = vmatpush2.bf16.xpose.msra.mxu0 0
        %1218 = vmatprep.subr.bf16.mxu0 0
        %1219 = vmatpush2.bf16.xpose.msra.mxu0 0
        %1220 = vmatprep.subr.bf16.mxu0 0
        %1221 = vmatpush2.bf16.xpose.msra.mxu0 0
        %1222 = vmatprep.subr.bf16.mxu0 0
        %1223 = vmatpush2.bf16.xpose.msra.mxu0 0
        %1224 = vmatprep.subr.bf16.mxu0 0
        %1225 = vmatpush2.bf16.xpose.msra.mxu0 0
        %1226 = vmatprep.subr.bf16.mxu0 0
        %1227 = vmatpush2.bf16.xpose.msra.mxu0 0
        %1228 = vmatprep.mubr.bf16.mxu0 0
        %1229 = vmatmul.mubr.bf16.gmra.mxu0 %v1191
        %v1230 = vpop.f32.mrf.mxu0
        %v1231 = vadd.f32 %v844, %v1230
        %v1232 = vpop.f32.mrf.mxu0
        %v1233 = vpop.f32.mrf.mxu0
        %v1234 = vpop.f32.mrf.mxu0
        %1235 = vdwg.mxu0
        %v1236 = vsel %vm893, %v1231, -inf
        %1237 = vmax.xlane.f32.xlu0 %v1236
        %v1238 = vpop.xlane.xlu0 %1237
        %v1239 = vsub.f32 %v1231, %v1238
        %v1240 = vmul.f32 %v1239, 1.442695
        %v1241 = vpow.pop %v1240
        %v1242 = vsel %vm893, %v1241, 0.0
        %1243 = vadd.xlane.f32.xlu0 %v1242
        %v1244 = vpop.xlane.xlu0 %1243
        %v1245 = vrcp.pop %v1244
        %v1246 = vmul.f32 %v1241, %v1245
        %v1247 = vpack.c.bf16 %v1246, %v1246
        %1248 = vrot.lane.b32.xlu0 %v839, 64
        %v1249 = vpop.permute.xlu0 %1248
        %v1251 = vsel %vm893, %v1247, 0
        %v1254 = vsel %vm909, %v1249, 0
        %1256 = vmatprep.subr.bf16.mxu0 0
        %1257 = vmatpush1.bf16.msra.mxu0 0
        %1258 = vmatprep.subr.bf16.mxu0 0
        %1259 = vmatpush1.bf16.msra.mxu0 0
        %1260 = vmatprep.subr.bf16.mxu0 0
        %1261 = vmatpush1.bf16.msra.mxu0 0
        %1262 = vmatprep.subr.bf16.mxu0 0
        %1263 = vmatpush1.bf16.msra.mxu0 0
        %1264 = vmatprep.subr.bf16.mxu0 0
        %1265 = vmatpush1.bf16.msra.mxu0 0
        %1266 = vmatprep.subr.bf16.mxu0 0
        %1267 = vmatpush1.bf16.msra.mxu0 0
        %1268 = vmatprep.subr.bf16.mxu0 0
        %1269 = vmatpush1.bf16.msra.mxu0 0
        %1270 = vmatprep.subr.bf16.mxu0 0
        %1271 = vmatpush1.bf16.msra.mxu0 %v1254
        %1272 = vmatprep.subr.bf16.mxu0 0
        %1273 = vmatpush2.bf16.msra.mxu0 0
        %1274 = vmatprep.subr.bf16.mxu0 0
        %1275 = vmatpush2.bf16.msra.mxu0 0
        %1276 = vmatprep.subr.bf16.mxu0 0
        %1277 = vmatpush2.bf16.msra.mxu0 0
        %1278 = vmatprep.subr.bf16.mxu0 0
        %1279 = vmatpush2.bf16.msra.mxu0 0
        %1280 = vmatprep.subr.bf16.mxu0 0
        %1281 = vmatpush2.bf16.msra.mxu0 0
        %1282 = vmatprep.subr.bf16.mxu0 0
        %1283 = vmatpush2.bf16.msra.mxu0 0
        %1284 = vmatprep.subr.bf16.mxu0 0
        %1285 = vmatpush2.bf16.msra.mxu0 0
        %1286 = vmatprep.subr.bf16.mxu0 0
        %1287 = vmatpush2.bf16.msra.mxu0 0
        %1288 = vmatprep.mubr.bf16.mxu0 0
        %1289 = vmatmul.mubr.bf16.gmra.mxu0 %v1251
        %v1290 = vpop.f32.mrf.mxu0
        %v1291 = vadd.f32 0.0, %v1290
        %v1292 = vpop.f32.mrf.mxu0
        %v1293 = vpop.f32.mrf.mxu0
        %v1294 = vpop.f32.mrf.mxu0
        %1295 = vdwg.mxu0
        %v1296 = vpack.c.bf16 %v1291, %v1291
        %v1297 = vld [vmem:[#allocation8 + $0x20] sm:$0xf]
        %v1298 = vld [vmem:[#allocation8 + $0x24] sm:$0xf]
        %v1299 = vld [vmem:[#allocation8 + $0x28] sm:$0xf]
        %v1300 = vld [vmem:[#allocation8 + $0x2c] sm:$0xf]
        %v1305 = vunpack.c.l.b16 %v1297
        %v1306 = vunpack.c.l.b16 %v1298
        %v1307 = vunpack.c.l.b16 %v1299
        %v1308 = vunpack.c.l.b16 %v1300
        %v1309 = vpack.c.b16 %v1306, %v1305
        %v1310 = vpack.c.b16 %v1308, %v1307
        %v1314 = vsel %vm846, %v1296, 0
        %1316 = vmatprep.subr.bf16.mxu0 0
        %1317 = vmatpush1.bf16.msra.mxu0 0
        %1318 = vmatprep.subr.bf16.mxu0 0
        %1319 = vmatpush1.bf16.msra.mxu0 0
        %1320 = vmatprep.subr.bf16.mxu0 0
        %1321 = vmatpush1.bf16.msra.mxu0 0
        %1322 = vmatprep.subr.bf16.mxu0 0
        %1323 = vmatpush1.bf16.msra.mxu0 0
        %1324 = vmatprep.subr.bf16.mxu0 0
        %1325 = vmatpush1.bf16.msra.mxu0 0
        %1326 = vmatprep.subr.bf16.mxu0 0
        %1327 = vmatpush1.bf16.msra.mxu0 0
        %1328 = vmatprep.subr.bf16.mxu0 0
        %1329 = vmatpush1.bf16.msra.mxu0 %v1310
        %1330 = vmatprep.subr.bf16.mxu0 0
        %1331 = vmatpush1.bf16.msra.mxu0 %v1309
        %1332 = vmatprep.subr.bf16.mxu0 0
        %1333 = vmatpush2.bf16.msra.mxu0 0
        %1334 = vmatprep.subr.bf16.mxu0 0
        %1335 = vmatpush2.bf16.msra.mxu0 0
        %1336 = vmatprep.subr.bf16.mxu0 0
        %1337 = vmatpush2.bf16.msra.mxu0 0
        %1338 = vmatprep.subr.bf16.mxu0 0
        %1339 = vmatpush2.bf16.msra.mxu0 0
        %1340 = vmatprep.subr.bf16.mxu0 0
        %1341 = vmatpush2.bf16.msra.mxu0 0
        %1342 = vmatprep.subr.bf16.mxu0 0
        %1343 = vmatpush2.bf16.msra.mxu0 0
        %1344 = vmatprep.subr.bf16.mxu0 0
        %1345 = vmatpush2.bf16.msra.mxu0 0
        %1346 = vmatprep.subr.bf16.mxu0 0
        %1347 = vmatpush2.bf16.msra.mxu0 0
        %1348 = vmatprep.mubr.bf16.mxu0 0
        %1349 = vmatmul.mubr.bf16.gmra.mxu0 %v1314
        %v1350 = vpop.f32.mrf.mxu0
        %v1351 = vadd.f32 0.0, %v1350
        %v1352 = vpop.f32.mrf.mxu0
        %v1353 = vpop.f32.mrf.mxu0
        %v1354 = vpop.f32.mrf.mxu0
        %1355 = vdwg.mxu0
        %v1356 = vadd.f32 %v1181, %v1351
        %1357 = vrot.lane.b32.xlu0 %v837, 32
        %v1358 = vpop.permute.xlu0 %1357
        %1359 = vrot.lane.b32.xlu0 %v838, 32
        %v1360 = vpop.permute.xlu0 %1359
        %v1362 = vsel %vm846, %v1358, 0
        %v1365 = vsel %vm846, %v1360, 0
        %1367 = vmatprep.subr.bf16.mxu0 0
        %1368 = vmatpush1.bf16.xpose.msra.mxu0 0
        %1369 = vmatprep.subr.bf16.mxu0 0
        %1370 = vmatpush1.bf16.xpose.msra.mxu0 0
        %1371 = vmatprep.subr.bf16.mxu0 0
        %1372 = vmatpush1.bf16.xpose.msra.mxu0 0
        %1373 = vmatprep.subr.bf16.mxu0 0
        %1374 = vmatpush1.bf16.xpose.msra.mxu0 0
        %1375 = vmatprep.subr.bf16.mxu0 0
        %1376 = vmatpush1.bf16.xpose.msra.mxu0 0
        %1377 = vmatprep.subr.bf16.mxu0 0
        %1378 = vmatpush1.bf16.xpose.msra.mxu0 0
        %1379 = vmatprep.subr.bf16.mxu0 0
        %1380 = vmatpush1.bf16.xpose.msra.mxu0 0
        %1381 = vmatprep.subr.bf16.mxu0 0
        %1382 = vmatpush1.bf16.xpose.msra.mxu0 %v1365
        %1383 = vmatprep.subr.bf16.mxu0 0
        %1384 = vmatpush2.bf16.xpose.msra.mxu0 0
        %1385 = vmatprep.subr.bf16.mxu0 0
        %1386 = vmatpush2.bf16.xpose.msra.mxu0 0
        %1387 = vmatprep.subr.bf16.mxu0 0
        %1388 = vmatpush2.bf16.xpose.msra.mxu0 0
        %1389 = vmatprep.subr.bf16.mxu0 0
        %1390 = vmatpush2.bf16.xpose.msra.mxu0 0
        %1391 = vmatprep.subr.bf16.mxu0 0
        %1392 = vmatpush2.bf16.xpose.msra.mxu0 0
        %1393 = vmatprep.subr.bf16.mxu0 0
        %1394 = vmatpush2.bf16.xpose.msra.mxu0 0
        %1395 = vmatprep.subr.bf16.mxu0 0
        %1396 = vmatpush2.bf16.xpose.msra.mxu0 0
        %1397 = vmatprep.subr.bf16.mxu0 0
        %1398 = vmatpush2.bf16.xpose.msra.mxu0 0
        %1399 = vmatprep.mubr.bf16.mxu0 0
        %1400 = vmatmul.mubr.bf16.gmra.mxu0 %v1362
        %v1401 = vpop.f32.mrf.mxu0
        %v1402 = vadd.f32 %v844, %v1401
        %v1403 = vpop.f32.mrf.mxu0
        %v1404 = vpop.f32.mrf.mxu0
        %v1405 = vpop.f32.mrf.mxu0
        %1406 = vdwg.mxu0
        %v1407 = vsel %vm893, %v1402, -inf
        %1408 = vmax.xlane.f32.xlu0 %v1407
        %v1409 = vpop.xlane.xlu0 %1408
        %v1410 = vsub.f32 %v1402, %v1409
        %v1411 = vmul.f32 %v1410, 1.442695
        %v1412 = vpow.pop %v1411
        %v1413 = vsel %vm893, %v1412, 0.0
        %1414 = vadd.xlane.f32.xlu0 %v1413
        %v1415 = vpop.xlane.xlu0 %1414
        %v1416 = vrcp.pop %v1415
        %v1417 = vmul.f32 %v1412, %v1416
        %v1418 = vpack.c.bf16 %v1417, %v1417
        %1419 = vrot.lane.b32.xlu0 %v839, 32
        %v1420 = vpop.permute.xlu0 %1419
        %v1422 = vsel %vm893, %v1418, 0
        %v1425 = vsel %vm909, %v1420, 0
        %1427 = vmatprep.subr.bf16.mxu0 0
        %1428 = vmatpush1.bf16.msra.mxu0 0
        %1429 = vmatprep.subr.bf16.mxu0 0
        %1430 = vmatpush1.bf16.msra.mxu0 0
        %1431 = vmatprep.subr.bf16.mxu0 0
        %1432 = vmatpush1.bf16.msra.mxu0 0
        %1433 = vmatprep.subr.bf16.mxu0 0
        %1434 = vmatpush1.bf16.msra.mxu0 0
        %1435 = vmatprep.subr.bf16.mxu0 0
        %1436 = vmatpush1.bf16.msra.mxu0 0
        %1437 = vmatprep.subr.bf16.mxu0 0
        %1438 = vmatpush1.bf16.msra.mxu0 0
        %1439 = vmatprep.subr.bf16.mxu0 0
        %1440 = vmatpush1.bf16.msra.mxu0 0
        %1441 = vmatprep.subr.bf16.mxu0 0
        %1442 = vmatpush1.bf16.msra.mxu0 %v1425
        %1443 = vmatprep.subr.bf16.mxu0 0
        %1444 = vmatpush2.bf16.msra.mxu0 0
        %1445 = vmatprep.subr.bf16.mxu0 0
        %1446 = vmatpush2.bf16.msra.mxu0 0
        %1447 = vmatprep.subr.bf16.mxu0 0
        %1448 = vmatpush2.bf16.msra.mxu0 0
        %1449 = vmatprep.subr.bf16.mxu0 0
        %1450 = vmatpush2.bf16.msra.mxu0 0
        %1451 = vmatprep.subr.bf16.mxu0 0
        %1452 = vmatpush2.bf16.msra.mxu0 0
        %1453 = vmatprep.subr.bf16.mxu0 0
        %1454 = vmatpush2.bf16.msra.mxu0 0
        %1455 = vmatprep.subr.bf16.mxu0 0
        %1456 = vmatpush2.bf16.msra.mxu0 0
        %1457 = vmatprep.subr.bf16.mxu0 0
        %1458 = vmatpush2.bf16.msra.mxu0 0
        %1459 = vmatprep.mubr.bf16.mxu0 0
        %1460 = vmatmul.mubr.bf16.gmra.mxu0 %v1422
        %v1461 = vpop.f32.mrf.mxu0
        %v1462 = vadd.f32 0.0, %v1461
        %v1463 = vpop.f32.mrf.mxu0
        %v1464 = vpop.f32.mrf.mxu0
        %v1465 = vpop.f32.mrf.mxu0
        %1466 = vdwg.mxu0
        %v1467 = vpack.c.bf16 %v1462, %v1462
        %v1468 = vld [vmem:[#allocation8 + $0x30] sm:$0xf]
        %v1469 = vld [vmem:[#allocation8 + $0x34] sm:$0xf]
        %v1470 = vld [vmem:[#allocation8 + $0x38] sm:$0xf]
        %v1471 = vld [vmem:[#allocation8 + $0x3c] sm:$0xf]
        %v1476 = vunpack.c.l.b16 %v1468
        %v1477 = vunpack.c.l.b16 %v1469
        %v1478 = vunpack.c.l.b16 %v1470
        %v1479 = vunpack.c.l.b16 %v1471
        %v1480 = vpack.c.b16 %v1477, %v1476
        %v1481 = vpack.c.b16 %v1479, %v1478
        %v1485 = vsel %vm846, %v1467, 0
        %1487 = vmatprep.subr.bf16.mxu0 0
        %1488 = vmatpush1.bf16.msra.mxu0 0
        %1489 = vmatprep.subr.bf16.mxu0 0
        %1490 = vmatpush1.bf16.msra.mxu0 0
        %1491 = vmatprep.subr.bf16.mxu0 0
        %1492 = vmatpush1.bf16.msra.mxu0 0
        %1493 = vmatprep.subr.bf16.mxu0 0
        %1494 = vmatpush1.bf16.msra.mxu0 0
        %1495 = vmatprep.subr.bf16.mxu0 0
        %1496 = vmatpush1.bf16.msra.mxu0 0
        %1497 = vmatprep.subr.bf16.mxu0 0
        %1498 = vmatpush1.bf16.msra.mxu0 0
        %1499 = vmatprep.subr.bf16.mxu0 0
        %1500 = vmatpush1.bf16.msra.mxu0 %v1481
        %1501 = vmatprep.subr.bf16.mxu0 0
        %1502 = vmatpush1.bf16.msra.mxu0 %v1480
        %1503 = vmatprep.subr.bf16.mxu0 0
        %1504 = vmatpush2.bf16.msra.mxu0 0
        %1505 = vmatprep.subr.bf16.mxu0 0
        %1506 = vmatpush2.bf16.msra.mxu0 0
        %1507 = vmatprep.subr.bf16.mxu0 0
        %1508 = vmatpush2.bf16.msra.mxu0 0
        %1509 = vmatprep.subr.bf16.mxu0 0
        %1510 = vmatpush2.bf16.msra.mxu0 0
        %1511 = vmatprep.subr.bf16.mxu0 0
        %1512 = vmatpush2.bf16.msra.mxu0 0
        %1513 = vmatprep.subr.bf16.mxu0 0
        %1514 = vmatpush2.bf16.msra.mxu0 0
        %1515 = vmatprep.subr.bf16.mxu0 0
        %1516 = vmatpush2.bf16.msra.mxu0 0
        %1517 = vmatprep.subr.bf16.mxu0 0
        %1518 = vmatpush2.bf16.msra.mxu0 0
        %1519 = vmatprep.mubr.bf16.mxu0 0
        %1520 = vmatmul.mubr.bf16.gmra.mxu0 %v1485
        %v1521 = vpop.f32.mrf.mxu0
        %v1522 = vadd.f32 0.0, %v1521
        %v1523 = vpop.f32.mrf.mxu0
        %v1524 = vpop.f32.mrf.mxu0
        %v1525 = vpop.f32.mrf.mxu0
        %1526 = vdwg.mxu0
        %v1527 = vadd.f32 %v1356, %v1522
        %v1528 = vld [vmem:[%s5] sm:$0x1]
        %v1530 = vlaneseq
        %v1531 = vshrl.u32 %v1530, 7
        %v1532 = vsub.s32 0, %v1531
        %v1533 = vrot.slane %v1528, %v1532
        %v1535 = vadd.f32 %v1527, %v1533
        %v1536 = vadd.f32 %v1535, %v576
        %v1537 = vld [vmem:[%s6] sm:$0x1]
        %v1538 = vld [vmem:[%s7] sm:$0x1]
        %1539 = vadd.xlane.f32.xlu0 %v1536
        %v1540 = vpop.xlane.xlu0 %1539
        %v1541 = vrcp.pop 128.0
        %v1542 = vmul.f32 %v1540, %v1541
        %v1543 = vsub.f32 %v1536, %v1542
        %v1544 = vmul.f32 %v1543, %v1543
        %1545 = vadd.xlane.f32.xlu0 %v1544
        %v1546 = vpop.xlane.xlu0 %1545
        %v1547 = vmul.f32 %v1546, %v1541
        %v1548 = vadd.f32 %v1547, 1e-12
        %v1549 = vrsqrt.pop %v1548
        %v1550 = vmul.f32 %v1543, %v1549
        %v1552 = vlaneseq
        %v1553 = vshrl.u32 %v1552, 7
        %v1554 = vsub.s32 0, %v1553
        %v1555 = vrot.slane %v1537, %v1554
        %v1557 = vmul.f32 %v1550, %v1555
        %v1559 = vlaneseq
        %v1560 = vshrl.u32 %v1559, 7
        %v1561 = vsub.s32 0, %v1560
        %v1562 = vrot.slane %v1538, %v1561
        %v1564 = vadd.f32 %v1557, %v1562
        %v1565 = vpack.c.bf16 %v1564, %v1564
        %v1566 = vld [vmem:[#allocation10] sm:$0xff]
        %v1567 = vld [vmem:[#allocation10 + $0x8] sm:$0xff]
        %v1568 = vld [vmem:[#allocation10 + $0x10] sm:$0xff]
        %v1569 = vld [vmem:[#allocation10 + $0x18] sm:$0xff]
        %v1570 = vld [vmem:[#allocation10 + $0x20] sm:$0xff]
        %v1571 = vld [vmem:[#allocation10 + $0x28] sm:$0xff]
        %v1572 = vld [vmem:[#allocation10 + $0x30] sm:$0xff]
        %v1573 = vld [vmem:[#allocation10 + $0x38] sm:$0xff]
        %v1574 = vld [vmem:[#allocation10 + $0x40] sm:$0xff]
        %v1575 = vld [vmem:[#allocation10 + $0x48] sm:$0xff]
        %v1576 = vld [vmem:[#allocation10 + $0x50] sm:$0xff]
        %v1577 = vld [vmem:[#allocation10 + $0x58] sm:$0xff]
        %v1578 = vld [vmem:[#allocation10 + $0x60] sm:$0xff]
        %v1579 = vld [vmem:[#allocation10 + $0x68] sm:$0xff]
        %v1580 = vld [vmem:[#allocation10 + $0x70] sm:$0xff]
        %v1581 = vld [vmem:[#allocation10 + $0x78] sm:$0xff]
        %v1582 = vld [vmem:[%s9] sm:$0x3]
        %v1584 = vlaneseq
        %v1585 = vshrl.u32 %v1584, 7
        %v1586 = vsub.s32 0, %v1585
        %v1587 = vrot.slane %v1582, %v1586
        %v1588 = vlaneseq
        %v1589 = vshrl.u32 %v1588, 7
        %v1590 = vsub.s32 1, %v1589
        %v1591 = vrot.slane %v1582, %v1590
        %v1610 = vunpack.c.l.b16 %v1566
        %v1611 = vunpack.c.h.b16 %v1566
        %v1612 = vunpack.c.l.b16 %v1567
        %v1613 = vunpack.c.h.b16 %v1567
        %v1614 = vunpack.c.l.b16 %v1568
        %v1615 = vunpack.c.h.b16 %v1568
        %v1616 = vunpack.c.l.b16 %v1569
        %v1617 = vunpack.c.h.b16 %v1569
        %v1618 = vunpack.c.l.b16 %v1570
        %v1619 = vunpack.c.h.b16 %v1570
        %v1620 = vunpack.c.l.b16 %v1571
        %v1621 = vunpack.c.h.b16 %v1571
        %v1622 = vunpack.c.l.b16 %v1572
        %v1623 = vunpack.c.h.b16 %v1572
        %v1624 = vunpack.c.l.b16 %v1573
        %v1625 = vunpack.c.h.b16 %v1573
        %v1626 = vunpack.c.l.b16 %v1574
        %v1627 = vunpack.c.h.b16 %v1574
        %v1628 = vunpack.c.l.b16 %v1575
        %v1629 = vunpack.c.h.b16 %v1575
        %v1630 = vunpack.c.l.b16 %v1576
        %v1631 = vunpack.c.h.b16 %v1576
        %v1632 = vunpack.c.l.b16 %v1577
        %v1633 = vunpack.c.h.b16 %v1577
        %v1634 = vunpack.c.l.b16 %v1578
        %v1635 = vunpack.c.h.b16 %v1578
        %v1636 = vunpack.c.l.b16 %v1579
        %v1637 = vunpack.c.h.b16 %v1579
        %v1638 = vunpack.c.l.b16 %v1580
        %v1639 = vunpack.c.h.b16 %v1580
        %v1640 = vunpack.c.l.b16 %v1581
        %v1641 = vunpack.c.h.b16 %v1581
        %v1642 = vpack.c.b16 %v1612, %v1610
        %v1643 = vpack.c.b16 %v1613, %v1611
        %v1644 = vpack.c.b16 %v1616, %v1614
        %v1645 = vpack.c.b16 %v1617, %v1615
        %v1646 = vpack.c.b16 %v1620, %v1618
        %v1647 = vpack.c.b16 %v1621, %v1619
        %v1648 = vpack.c.b16 %v1624, %v1622
        %v1649 = vpack.c.b16 %v1625, %v1623
        %v1650 = vpack.c.b16 %v1628, %v1626
        %v1651 = vpack.c.b16 %v1629, %v1627
        %v1652 = vpack.c.b16 %v1632, %v1630
        %v1653 = vpack.c.b16 %v1633, %v1631
        %v1654 = vpack.c.b16 %v1636, %v1634
        %v1655 = vpack.c.b16 %v1637, %v1635
        %v1656 = vpack.c.b16 %v1640, %v1638
        %v1657 = vpack.c.b16 %v1641, %v1639
        %1674 = vmatprep.subr.bf16.mxu0 %v1657
        %1675 = vmatpush1.bf16.msra.mxu0 %v1656
        %1676 = vmatprep.subr.bf16.mxu0 %v1655
        %1677 = vmatpush1.bf16.msra.mxu0 %v1654
        %1678 = vmatprep.subr.bf16.mxu0 %v1653
        %1679 = vmatpush1.bf16.msra.mxu0 %v1652
        %1680 = vmatprep.subr.bf16.mxu0 %v1651
        %1681 = vmatpush1.bf16.msra.mxu0 %v1650
        %1682 = vmatprep.subr.bf16.mxu0 %v1649
        %1683 = vmatpush1.bf16.msra.mxu0 %v1648
        %1684 = vmatprep.subr.bf16.mxu0 %v1647
        %1685 = vmatpush1.bf16.msra.mxu0 %v1646
        %1686 = vmatprep.subr.bf16.mxu0 %v1645
        %1687 = vmatpush1.bf16.msra.mxu0 %v1644
        %1688 = vmatprep.subr.bf16.mxu0 %v1643
        %1689 = vmatpush1.bf16.msra.mxu0 %v1642
        %1690 = vmatprep.subr.bf16.mxu0 0
        %1691 = vmatpush2.bf16.msra.mxu0 0
        %1692 = vmatprep.subr.bf16.mxu0 0
        %1693 = vmatpush2.bf16.msra.mxu0 0
        %1694 = vmatprep.subr.bf16.mxu0 0
        %1695 = vmatpush2.bf16.msra.mxu0 0
        %1696 = vmatprep.subr.bf16.mxu0 0
        %1697 = vmatpush2.bf16.msra.mxu0 0
        %1698 = vmatprep.subr.bf16.mxu0 0
        %1699 = vmatpush2.bf16.msra.mxu0 0
        %1700 = vmatprep.subr.bf16.mxu0 0
        %1701 = vmatpush2.bf16.msra.mxu0 0
        %1702 = vmatprep.subr.bf16.mxu0 0
        %1703 = vmatpush2.bf16.msra.mxu0 0
        %1704 = vmatprep.subr.bf16.mxu0 0
        %1705 = vmatpush2.bf16.msra.mxu0 0
        %1706 = vmatprep.mubr.bf16.mxu0 0
        %1707 = vmatmul.mubr.bf16.gmra.mxu0 %v1565
        %v1708 = vpop.f32.mrf.mxu0
        %v1709 = vadd.f32 %v1587, %v1708
        %v1710 = vpop.f32.mrf.mxu0
        %v1711 = vadd.f32 %v1591, %v1710
        %v1712 = vpop.f32.mrf.mxu0
        %v1713 = vpop.f32.mrf.mxu0
        %1714 = vdwg.mxu0
        %v1715 = vmul.f32 %v1709, 0.5
        %v1716 = vmul.f32 %v1711, 0.5
        %v1717 = vmul.f32 %v1709, 0.70710677
        %v1718 = vmul.f32 %v1711, 0.70710677
        %v1719 = verf.f32.pop %v1717
        %v1720 = verf.f32.pop %v1718
        %v1721 = vadd.f32 %v1719, 1.0
        %v1722 = vadd.f32 %v1720, 1.0
        %v1723 = vmul.f32 %v1715, %v1721
        %v1724 = vmul.f32 %v1716, %v1722
        %v1725 = vpack.c.bf16 %v1723, %v1723
        %v1726 = vpack.c.bf16 %v1724, %v1724
        %v1727 = vld [vmem:[#allocation11] sm:$0xf]
        %v1728 = vld [vmem:[#allocation11 + $0x4] sm:$0xf]
        %v1729 = vld [vmem:[#allocation11 + $0x8] sm:$0xf]
        %v1730 = vld [vmem:[#allocation11 + $0xc] sm:$0xf]
        %v1731 = vld [vmem:[#allocation11 + $0x10] sm:$0xf]
        %v1732 = vld [vmem:[#allocation11 + $0x14] sm:$0xf]
        %v1733 = vld [vmem:[#allocation11 + $0x18] sm:$0xf]
        %v1734 = vld [vmem:[#allocation11 + $0x1c] sm:$0xf]
        %v1735 = vld [vmem:[#allocation11 + $0x20] sm:$0xf]
        %v1736 = vld [vmem:[#allocation11 + $0x24] sm:$0xf]
        %v1737 = vld [vmem:[#allocation11 + $0x28] sm:$0xf]
        %v1738 = vld [vmem:[#allocation11 + $0x2c] sm:$0xf]
        %v1739 = vld [vmem:[#allocation11 + $0x30] sm:$0xf]
        %v1740 = vld [vmem:[#allocation11 + $0x34] sm:$0xf]
        %v1741 = vld [vmem:[#allocation11 + $0x38] sm:$0xf]
        %v1742 = vld [vmem:[#allocation11 + $0x3c] sm:$0xf]
        %v1743 = vld [vmem:[#allocation11 + $0x40] sm:$0xf]
        %v1744 = vld [vmem:[#allocation11 + $0x44] sm:$0xf]
        %v1745 = vld [vmem:[#allocation11 + $0x48] sm:$0xf]
        %v1746 = vld [vmem:[#allocation11 + $0x4c] sm:$0xf]
        %v1747 = vld [vmem:[#allocation11 + $0x50] sm:$0xf]
        %v1748 = vld [vmem:[#allocation11 + $0x54] sm:$0xf]
        %v1749 = vld [vmem:[#allocation11 + $0x58] sm:$0xf]
        %v1750 = vld [vmem:[#allocation11 + $0x5c] sm:$0xf]
        %v1751 = vld [vmem:[#allocation11 + $0x60] sm:$0xf]
        %v1752 = vld [vmem:[#allocation11 + $0x64] sm:$0xf]
        %v1753 = vld [vmem:[#allocation11 + $0x68] sm:$0xf]
        %v1754 = vld [vmem:[#allocation11 + $0x6c] sm:$0xf]
        %v1755 = vld [vmem:[#allocation11 + $0x70] sm:$0xf]
        %v1756 = vld [vmem:[#allocation11 + $0x74] sm:$0xf]
        %v1757 = vld [vmem:[#allocation11 + $0x78] sm:$0xf]
        %v1758 = vld [vmem:[#allocation11 + $0x7c] sm:$0xf]
        %v1759 = vld [vmem:[%s11] sm:$0x1]
        %v1761 = vlaneseq
        %v1762 = vshrl.u32 %v1761, 7
        %v1763 = vsub.s32 0, %v1762
        %v1764 = vrot.slane %v1759, %v1763
        %v1798 = vunpack.c.l.b16 %v1727
        %v1799 = vunpack.c.l.b16 %v1728
        %v1800 = vunpack.c.l.b16 %v1729
        %v1801 = vunpack.c.l.b16 %v1730
        %v1802 = vunpack.c.l.b16 %v1731
        %v1803 = vunpack.c.l.b16 %v1732
        %v1804 = vunpack.c.l.b16 %v1733
        %v1805 = vunpack.c.l.b16 %v1734
        %v1806 = vunpack.c.l.b16 %v1735
        %v1807 = vunpack.c.l.b16 %v1736
        %v1808 = vunpack.c.l.b16 %v1737
        %v1809 = vunpack.c.l.b16 %v1738
        %v1810 = vunpack.c.l.b16 %v1739
        %v1811 = vunpack.c.l.b16 %v1740
        %v1812 = vunpack.c.l.b16 %v1741
        %v1813 = vunpack.c.l.b16 %v1742
        %v1814 = vunpack.c.l.b16 %v1743
        %v1815 = vunpack.c.l.b16 %v1744
        %v1816 = vunpack.c.l.b16 %v1745
        %v1817 = vunpack.c.l.b16 %v1746
        %v1818 = vunpack.c.l.b16 %v1747
        %v1819 = vunpack.c.l.b16 %v1748
        %v1820 = vunpack.c.l.b16 %v1749
        %v1821 = vunpack.c.l.b16 %v1750
        %v1822 = vunpack.c.l.b16 %v1751
        %v1823 = vunpack.c.l.b16 %v1752
        %v1824 = vunpack.c.l.b16 %v1753
        %v1825 = vunpack.c.l.b16 %v1754
        %v1826 = vunpack.c.l.b16 %v1755
        %v1827 = vunpack.c.l.b16 %v1756
        %v1828 = vunpack.c.l.b16 %v1757
        %v1829 = vunpack.c.l.b16 %v1758
        %v1830 = vpack.c.b16 %v1799, %v1798
        %v1831 = vpack.c.b16 %v1801, %v1800
        %v1832 = vpack.c.b16 %v1803, %v1802
        %v1833 = vpack.c.b16 %v1805, %v1804
        %v1834 = vpack.c.b16 %v1807, %v1806
        %v1835 = vpack.c.b16 %v1809, %v1808
        %v1836 = vpack.c.b16 %v1811, %v1810
        %v1837 = vpack.c.b16 %v1813, %v1812
        %v1838 = vpack.c.b16 %v1815, %v1814
        %v1839 = vpack.c.b16 %v1817, %v1816
        %v1840 = vpack.c.b16 %v1819, %v1818
        %v1841 = vpack.c.b16 %v1821, %v1820
        %v1842 = vpack.c.b16 %v1823, %v1822
        %v1843 = vpack.c.b16 %v1825, %v1824
        %v1844 = vpack.c.b16 %v1827, %v1826
        %v1845 = vpack.c.b16 %v1829, %v1828
        %1862 = vmatprep.subr.bf16.mxu0 0
        %1863 = vmatpush1.bf16.msra.mxu0 %v1837
        %1864 = vmatprep.subr.bf16.mxu0 0
        %1865 = vmatpush1.bf16.msra.mxu0 %v1836
        %1866 = vmatprep.subr.bf16.mxu0 0
        %1867 = vmatpush1.bf16.msra.mxu0 %v1835
        %1868 = vmatprep.subr.bf16.mxu0 0
        %1869 = vmatpush1.bf16.msra.mxu0 %v1834
        %1870 = vmatprep.subr.bf16.mxu0 0
        %1871 = vmatpush1.bf16.msra.mxu0 %v1833
        %1872 = vmatprep.subr.bf16.mxu0 0
        %1873 = vmatpush1.bf16.msra.mxu0 %v1832
        %1874 = vmatprep.subr.bf16.mxu0 0
        %1875 = vmatpush1.bf16.msra.mxu0 %v1831
        %1876 = vmatprep.subr.bf16.mxu0 0
        %1877 = vmatpush1.bf16.msra.mxu0 %v1830
        %1878 = vmatprep.subr.bf16.mxu0 0
        %1879 = vmatpush2.bf16.msra.mxu0 %v1845
        %1880 = vmatprep.subr.bf16.mxu0 0
        %1881 = vmatpush2.bf16.msra.mxu0 %v1844
        %1882 = vmatprep.subr.bf16.mxu0 0
        %1883 = vmatpush2.bf16.msra.mxu0 %v1843
        %1884 = vmatprep.subr.bf16.mxu0 0
        %1885 = vmatpush2.bf16.msra.mxu0 %v1842
        %1886 = vmatprep.subr.bf16.mxu0 0
        %1887 = vmatpush2.bf16.msra.mxu0 %v1841
        %1888 = vmatprep.subr.bf16.mxu0 0
        %1889 = vmatpush2.bf16.msra.mxu0 %v1840
        %1890 = vmatprep.subr.bf16.mxu0 0
        %1891 = vmatpush2.bf16.msra.mxu0 %v1839
        %1892 = vmatprep.subr.bf16.mxu0 0
        %1893 = vmatpush2.bf16.msra.mxu0 %v1838
        %1894 = vmatprep.mubr.bf16.mxu0 %v1726
        %1895 = vmatmul.mubr.bf16.gmra.mxu0 %v1725
        %v1896 = vpop.f32.mrf.mxu0
        %v1897 = vadd.f32 %v1764, %v1896
        %v1898 = vpop.f32.mrf.mxu0
        %v1899 = vpop.f32.mrf.mxu0
        %v1900 = vpop.f32.mrf.mxu0
        %1901 = vdwg.mxu0
        %v1902 = vadd.f32 %v1897, %v1564
        %v1903 = vld [vmem:[%s12] sm:$0x1]
        %v1904 = vld [vmem:[%s13] sm:$0x1]
        %1905 = vadd.xlane.f32.xlu0 %v1902
        %v1906 = vpop.xlane.xlu0 %1905
        %v1907 = vmul.f32 %v1906, %v1541
        %v1908 = vsub.f32 %v1902, %v1907
        %v1909 = vmul.f32 %v1908, %v1908
        %1910 = vadd.xlane.f32.xlu0 %v1909
        %v1911 = vpop.xlane.xlu0 %1910
        %v1912 = vmul.f32 %v1911, %v1541
        %v1913 = vadd.f32 %v1912, 1e-12
        %v1914 = vrsqrt.pop %v1913
        %v1915 = vmul.f32 %v1908, %v1914
        %v1917 = vlaneseq
        %v1918 = vshrl.u32 %v1917, 7
        %v1919 = vsub.s32 0, %v1918
        %v1920 = vrot.slane %v1903, %v1919
        %v1922 = vmul.f32 %v1915, %v1920
        %v1924 = vlaneseq
        %v1925 = vshrl.u32 %v1924, 7
        %v1926 = vsub.s32 0, %v1925
        %v1927 = vrot.slane %v1904, %v1926
        %v1929 = vadd.f32 %v1922, %v1927
        %1930 = vst [vmem:[%s574] sm:$0xff] %v1929
        %s1931 = sand.u32 %s348, 1
        %s1932 = scalar_lea.sflag [#allocation4], %s1931
        %s1933 = sand.u32 %s348, 1
        %s1934 = smul.addr %s1933, 8
        %s1935 = scalar_lea.vmem [#allocation13], %s1934
        // Predicated region
        $region101: #{tpu_custom_call.1} parent=75 // pred_check
          %p1936 = pneg %p358
        $region102: #{tpu_custom_call.1} parent=75 // pred_check_branch
          %1938 = sbr.rel (%p1936) target = $region104
        $region103: #{tpu_custom_call.1} parent=75 // pred_region
          %s1940 = ssub.s32 128, 128
          %1941 = vsyncadd %s1932, %s1940
          %s1942 = smul.addr %s36, 128
          %s1943 = scalar_lea.hbm %s14, %s1942
          %s1945 = sshll.u32 %s1935, 4
          %s1946 = int_to_ptr.vmem [resolvable:$true] %s1945
          %1948 = dma.vmem_to_hbm [thread:$0]  %s1946, 128, %s1943, %s1932
        $region104: #{tpu_custom_call.1} parent=75 // pred_fallthru
          _
      $region76: #{tpu_custom_call.1} parent=5 // pred_fallthru
        _
      %p1949 = scmp.le.s32.totalorder 2, %s31
      // Predicated region
      $region105: #{tpu_custom_call.1} parent=5 // pred_check
        %p1950 = pneg %p1949
      $region106: #{tpu_custom_call.1} parent=5 // pred_check_branch
        %1952 = sbr.rel (%p1950) target = $region108
      $region107: #{tpu_custom_call.1} parent=5 // pred_region
        %s1953 = ssub.s32 %s31, 2
        // Predicated region
        $region109: #{tpu_custom_call.1} parent=107 // pred_check
          %p1954 = pneg %p364
        $region110: #{tpu_custom_call.1} parent=107 // pred_check_branch
          %1956 = sbr.rel (%p1954) target = $region112
        $region111: #{tpu_custom_call.1} parent=107 // pred_region
          %s1957 = sand.u32 %s349, 1
          %s1958 = scalar_lea.sflag [#allocation4], %s1957
          %s1959 = sand.u32 %s349, 1
          %s1960 = smul.addr %s1959, 8
          %s1961 = scalar_lea.vmem [#allocation13], %s1960
          %1962 = dma.done %s1958, 128
        $region112: #{tpu_custom_call.1} parent=107 // pred_fallthru
          _
      $region108: #{tpu_custom_call.1} parent=5 // pred_fallthru
        _
    $region6: #{tpu_custom_call.1} parent=1 // loop_footer
      %s35 = sadd.s32 1, %s31
    $region7: #{tpu_custom_call.1} parent=1 // loop_footer_branch
      %30 = sbr.rel target = $region3
    $region8: #{tpu_custom_call.1} parent=1 // loop_exit
      _
    %1963 = vsyncpa [#allocation3], 1
    %s1964 = scalar_lea.sflag [#allocation3], 1
    %1965 = vsyncpa %s1964, 1
    %1966 = vsyncpa [#allocation6], 1
    %s1967 = scalar_lea.sflag [#allocation6], 1
    %1968 = vsyncpa %s1967, 1
    %1969 = vsyncpa [#allocation9], 1
    %1970 = vsyncpa [#allocation12], 1
    %1971 = vsyncpa [#allocation4], 1
    %s1972 = scalar_lea.sflag [#allocation4], 1
    %1973 = vsyncpa %s1972, 1

</llo_original>
